<compile_context>
chip_gen: v6e
topology: v6e:2x2x1
jax: 0.10.0
libtpu: 0.0.40
codegen_flags: <defaults>
</compile_context>

<pallas_src>
import functools
import math

import jax
import jax.numpy as jnp
from jax import lax
from jax.experimental import pallas as pl
from jax.experimental.pallas import tpu as pltpu


# ----------------------------------------------------------------------------
# Pallas kernel: one grid step == one time chunk of one encoder.
# Gate order follows torch.nn.LSTM: i, f, g, o.
# ----------------------------------------------------------------------------
def _double_lstm_chunk_kernel(emb_ref, wih_ref, whh_ref, bias_ref,
                              out_ref, hN_ref, cN_ref,
                              h_sc, c_sc, gx_sc,
                              *, seq_lens, hidden, t_chunk):
    """One time-chunk of one LSTM encoder.

    emb_ref : (1, T, B, E)  bf16   embedded inputs for this chunk
    wih_ref : (1, E, 4H)    bf16   input weight, pre-transposed
    whh_ref : (1, H, 4H)    bf16   recurrent weight, pre-transposed
    bias_ref: (1, 1, 4H)    f32    b_ih + b_hh
    out_ref : (1, T, B, H)  f32    memory-bank window for this chunk
    hN_ref  : (1, B, H)     f32    final hidden state (written on last chunk)
    cN_ref  : (1, B, H)     f32    final cell state   (written on last chunk)
    h_sc,c_sc: (B, H) f32 VMEM     carried LSTM state across chunks
    gx_sc   : (T, B, 4H) f32 VMEM  per-chunk input projection
    """
    e = pl.program_id(0)
    chunk = pl.program_id(1)
    n_chunks = pl.num_programs(1)
    H = hidden
    H4 = 4 * H
    T = t_chunk
    B = emb_ref.shape[2]

    # True (unpadded) length of this encoder's sequence (static per encoder,
    # selected at runtime by the encoder grid index).
    n = jnp.int32(seq_lens[0])
    for idx in range(1, len(seq_lens)):
        n = jnp.where(e == idx, jnp.int32(seq_lens[idx]), n)

    chunk_start = chunk * T

    @pl.when(chunk == 0)
    def _init():
        h_sc[...] = jnp.zeros_like(h_sc)
        c_sc[...] = jnp.zeros_like(c_sc)

    @pl.when(chunk_start < n)
    def _active():
        # Per-chunk input projection: one MXU matmul OFF the serial path,
        # bf16 operands, f32 accumulation, bias folded in.
        emb2 = emb_ref[0].reshape(T * B, emb_ref.shape[3])           # (T*B, E) bf16
        gx = jnp.dot(emb2, wih_ref[0], preferred_element_type=jnp.float32)
        gx_sc[...] = gx.reshape(T, B, H4) + bias_ref[0]              # (T,B,4H) f32

        whh = whh_ref[0]                                             # (H,4H) bf16

        def step(t, carry):
            h, c = carry
            # Serial critical path: recurrent matmul (bf16 operands, f32 acc)
            # + elementwise gates (f32).
            gates = (jnp.dot(h.astype(whh.dtype), whh,
                             preferred_element_type=jnp.float32)
                     + gx_sc[t])                                     # (B,4H)
            i_g = jax.nn.sigmoid(gates[:, 0 * H:1 * H])
            f_g = jax.nn.sigmoid(gates[:, 1 * H:2 * H])
            g_g = jnp.tanh(gates[:, 2 * H:3 * H])
            o_g = jax.nn.sigmoid(gates[:, 3 * H:4 * H])
            c_new = f_g * c + i_g * g_g
            h_new = o_g * jnp.tanh(c_new)
            valid = (chunk_start + t) < n
            # Zero padded rows so the padded memory bank is safe to consume.
            out_ref[0, t] = jnp.where(valid, h_new, 0.0).astype(out_ref.dtype)
            # Freeze the carry past the real sequence end.
            return jnp.where(valid, h_new, h), jnp.where(valid, c_new, c)

        unroll = True if T <= 32 else 8
        hN, cN = lax.fori_loop(0, T, step, (h_sc[...], c_sc[...]), unroll=unroll)
        h_sc[...] = hN
        c_sc[...] = cN

    @pl.when(chunk_start >= n)
    def _inactive():
        # Fully padded chunk (shorter encoder): skip all compute, zero the bank.
        out_ref[...] = jnp.zeros_like(out_ref)

    @pl.when(chunk == n_chunks - 1)
    def _final():
        hN_ref[0] = h_sc[...]
        cN_ref[0] = c_sc[...]


def _vmem_budget_bytes(t_chunk, B, E, H):
    """Explicit VMEM budget: double-buffered pipelined blocks + scratch + headroom."""
    bf16, f32 = 2, 4
    H4 = 4 * H
    blocks = (t_chunk * B * E * bf16       # emb chunk
              + E * H4 * bf16              # W_ih
              + H * H4 * bf16              # W_hh
              + H4 * f32                   # bias
              + t_chunk * B * H * f32      # out chunk
              + 2 * B * H * f32)           # hN, cN
    scratch = (2 * B * H + t_chunk * B * H4) * f32
    total = 2 * blocks + scratch + (4 << 20)
    return int(min(max(total, 32 << 20), 112 << 20))


def double_lstm_pallas(emb_all, wih_all, whh_all, bias_all, seq_lens, *, t_chunk):
    """Run NE independent LSTM recurrences over a time-chunked grid.

    emb_all : (NE, S_pad, B, E) bf16   embedded, time-padded inputs
    wih_all : (NE, E, 4H) bf16         pre-transposed input weights
    whh_all : (NE, H, 4H) bf16         pre-transposed recurrent weights
    bias_all: (NE, 1, 4H) f32          b_ih + b_hh
    seq_lens: tuple of NE Python ints  (true lengths before padding)

    Returns (outputs (NE,S_pad,B,H) f32, h_n (NE,B,H) f32, c_n (NE,B,H) f32).
    """
    NE, S_pad, B, E = emb_all.shape
    H = whh_all.shape[1]
    H4 = 4 * H
    assert wih_all.shape == (NE, E, H4)
    assert whh_all.shape == (NE, H, H4)
    assert bias_all.shape == (NE, 1, H4)
    assert S_pad % t_chunk == 0
    assert len(seq_lens) == NE
    n_chunks = S_pad // t_chunk

    kernel = functools.partial(
        _double_lstm_chunk_kernel,
        seq_lens=tuple(int(s) for s in seq_lens),
        hidden=H, t_chunk=t_chunk)

    grid_spec = pltpu.PrefetchScalarGridSpec(
        num_scalar_prefetch=0,
        grid=(NE, n_chunks),                                # encoder outer, time inner
        in_specs=[
            pl.BlockSpec((1, t_chunk, B, E), lambda e, c: (e, c, 0, 0)),  # emb chunk
            pl.BlockSpec((1, E, H4), lambda e, c: (e, 0, 0)),             # W_ih_t
            pl.BlockSpec((1, H, H4), lambda e, c: (e, 0, 0)),             # W_hh_t
            pl.BlockSpec((1, 1, H4), lambda e, c: (e, 0, 0)),             # bias
        ],
        out_specs=[
            pl.BlockSpec((1, t_chunk, B, H), lambda e, c: (e, c, 0, 0)),  # outputs
            pl.BlockSpec((1, B, H), lambda e, c: (e, 0, 0)),              # h_n
            pl.BlockSpec((1, B, H), lambda e, c: (e, 0, 0)),              # c_n
        ],
        scratch_shapes=[
            pltpu.VMEM((B, H), jnp.float32),                 # h carry
            pltpu.VMEM((B, H), jnp.float32),                 # c carry
            pltpu.VMEM((t_chunk, B, H4), jnp.float32),       # per-chunk gx
        ],
    )

    return pl.pallas_call(
        kernel,
        out_shape=(
            jax.ShapeDtypeStruct((NE, S_pad, B, H), jnp.float32),
            jax.ShapeDtypeStruct((NE, B, H), jnp.float32),
            jax.ShapeDtypeStruct((NE, B, H), jnp.float32),
        ),
        grid_spec=grid_spec,
        compiler_params=pltpu.CompilerParams(
            dimension_semantics=("parallel", "arbitrary"),
            vmem_limit_bytes=_vmem_budget_bytes(t_chunk, B, E, H),
        ),
    )(emb_all, wih_all, whh_all, bias_all)


# ----------------------------------------------------------------------------
# Pure-JAX f32 reference (for numerical check only).  Uses transposed weights.
# ----------------------------------------------------------------------------
def lstm_ref(x_emb, w_ih_t, w_hh_t, bias):
    B = x_emb.shape[1]
    H = w_hh_t.shape[0]

    def step(carry, x):
        h, c = carry
        gates = x @ w_ih_t + h @ w_hh_t + bias
        i, f, g, o = jnp.split(gates, 4, axis=-1)
        i = jax.nn.sigmoid(i)
        f = jax.nn.sigmoid(f)
        g = jnp.tanh(g)
        o = jax.nn.sigmoid(o)
        c = f * c + i * g
        h = o * jnp.tanh(c)
        return (h, c), h

    init = (jnp.zeros((B, H), jnp.float32), jnp.zeros((B, H), jnp.float32))
    (hN, cN), outs = jax.lax.scan(step, init, x_emb)
    return outs, hN, cN


def _pad_time(x, s_pad):
    s = x.shape[0]
    if s == s_pad:
        return x
    return jnp.pad(x, ((0, s_pad - s), (0, 0), (0, 0)))


# ----------------------------------------------------------------------------
# DoubleRNNEncoder in JAX: embedding gathers (glue) + one fused, time-chunked
# Pallas kernel running both serial LSTM recurrences.
# ----------------------------------------------------------------------------
class DoubleRNNEncoderPallas:
    def __init__(self, key, vocab_src, vocab_inter, emb_dim, hidden_size,
                 t_chunk=16):
        # num_directions = 1 (bidirectional=False), num_layers = 1
        H = hidden_size
        ks = jax.random.split(key, 10)
        bound = 1.0 / math.sqrt(H)

        def u(k, shape):
            return jax.random.uniform(k, shape, jnp.float32, -bound, bound)

        # embeddings
        self.emb_src = jax.random.normal(ks[0], (vocab_src, emb_dim), jnp.float32) * 0.1
        self.emb_inter = jax.random.normal(ks[1], (vocab_inter, emb_dim), jnp.float32) * 0.1

        # LSTM params, generated in torch layout then stored PRE-TRANSPOSED:
        #   w_ih_t: (E, 4H), w_hh_t: (H, 4H), bias = b_ih + b_hh: (4H,)
        self.w_ih1_t = u(ks[2], (4 * H, emb_dim)).T
        self.w_hh1_t = u(ks[3], (4 * H, H)).T
        self.b1 = u(ks[4], (4 * H,)) + u(ks[5], (4 * H,))

        self.w_ih2_t = u(ks[6], (4 * H, emb_dim)).T
        self.w_hh2_t = u(ks[7], (4 * H, H)).T
        self.b2 = u(ks[8], (4 * H,)) + u(ks[9], (4 * H,))

        # Pre-packed bf16 matmul operands (f32 masters kept for the reference).
        self._wih_all = jnp.stack([self.w_ih1_t, self.w_ih2_t]).astype(jnp.bfloat16)
        self._whh_all = jnp.stack([self.w_hh1_t, self.w_hh2_t]).astype(jnp.bfloat16)
        self._bias_all = jnp.stack([self.b1, self.b2])[:, None, :]   # (2,1,4H) f32

        self.hidden_size = H
        self.t_chunk = t_chunk

    def __call__(self, input_pair):
        """input_pair: (tokens_src (S1,B) int32, tokens_inter (S2,B) int32).

        Returns (src_hidden_t, src_outputs, inter_hidden_t, inter_outputs),
        where *_hidden_t = (h_n, c_n), each (1, B, H), and *_outputs is
        (len, B, H) -- matching the PyTorch module (lengths=None path).
        """
        tok_src, tok_inter = input_pair

        # Embedding lookups (plain-JAX gather glue).
        src_emb = jnp.take(self.emb_src, tok_src, axis=0)        # (S1, B, E)
        inter_emb = jnp.take(self.emb_inter, tok_inter, axis=0)  # (S2, B, E)

        S1 = int(src_emb.shape[0])
        S2 = int(inter_emb.shape[0])
        S_max = max(S1, S2)
        T = min(self.t_chunk, S_max)
        S_pad = ((S_max + T - 1) // T) * T

        emb_all = jnp.stack([_pad_time(src_emb, S_pad),
                             _pad_time(inter_emb, S_pad)]).astype(jnp.bfloat16)

        out_all, hN_all, cN_all = double_lstm_pallas(
            emb_all, self._wih_all, self._whh_all, self._bias_all,
            (S1, S2), t_chunk=T)

        src_out = out_all[0, :S1]
        inter_out = out_all[1, :S2]
        src_hidden_t = (hN_all[0][None, :, :], cN_all[0][None, :, :])   # (1,B,H) each
        inter_hidden_t = (hN_all[1][None, :, :], cN_all[1][None, :, :])
        return src_hidden_t, src_out, inter_hidden_t, inter_out


if __name__ == "__main__":
    key = jax.random.PRNGKey(0)
    k_params, k_src, k_inter = jax.random.split(key, 3)

    # Lane/sublane-aligned small shapes (B multiple of 8, H multiple of 128).
    VOCAB_SRC, VOCAB_INTER = 50, 40
    EMB_DIM, HIDDEN = 64, 128
    S_SRC, S_INTER, BATCH = 8, 6, 8
    T_CHUNK = 4   # 2 time chunks; inter encoder exercises the partial-chunk mask

    enc = DoubleRNNEncoderPallas(k_params, VOCAB_SRC, VOCAB_INTER, EMB_DIM,
                                 HIDDEN, t_chunk=T_CHUNK)

    tok_src = jax.random.randint(k_src, (S_SRC, BATCH), 0, VOCAB_SRC, jnp.int32)
    tok_inter = jax.random.randint(k_inter, (S_INTER, BATCH), 0, VOCAB_INTER, jnp.int32)

    (src_hid, src_out, inter_hid, inter_out) = enc((tok_src, tok_inter))
    jax.block_until_ready((src_hid, src_out, inter_hid, inter_out))

    # Numerical check vs pure-JAX f32 LSTM reference.  The kernel uses bf16
    # matmul operands (f32 accumulation and f32 h/c carry), so the tolerance
    # is relaxed accordingly.
    TOL = 2e-2

    src_emb = jnp.take(enc.emb_src, tok_src, axis=0)
    ref_out, ref_h, ref_c = lstm_ref(src_emb, enc.w_ih1_t, enc.w_hh1_t, enc.b1)
    assert float(jnp.max(jnp.abs(src_out - ref_out))) < TOL
    assert float(jnp.max(jnp.abs(src_hid[0][0] - ref_h))) < TOL
    assert float(jnp.max(jnp.abs(src_hid[1][0] - ref_c))) < TOL

    inter_emb = jnp.take(enc.emb_inter, tok_inter, axis=0)
    ref_out2, ref_h2, ref_c2 = lstm_ref(inter_emb, enc.w_ih2_t, enc.w_hh2_t, enc.b2)
    assert float(jnp.max(jnp.abs(inter_out - ref_out2))) < TOL
    assert float(jnp.max(jnp.abs(inter_hid[0][0] - ref_h2))) < TOL
    assert float(jnp.max(jnp.abs(inter_hid[1][0] - ref_c2))) < TOL

    print("KERNEL_OK")
</pallas_src>

<mosaic_0001>
module attributes {stable_mosaic.version = 11 : i64} {
  func.func @_double_lstm_chunk_kernel(%arg0: i32, %arg1: i32, %arg2: memref<1x4x8x64xbf16, #tpu.memory_space<vmem>>, %arg3: memref<1x64x512xbf16, #tpu.memory_space<vmem>>, %arg4: memref<1x128x512xbf16, #tpu.memory_space<vmem>>, %arg5: memref<1x1x512xf32, #tpu.memory_space<vmem>>, %arg6: memref<1x4x8x128xf32, #tpu.memory_space<vmem>>, %arg7: memref<1x8x128xf32, #tpu.memory_space<vmem>>, %arg8: memref<1x8x128xf32, #tpu.memory_space<vmem>>, %arg9: memref<8x128xf32, #tpu.memory_space<vmem>>, %arg10: memref<8x128xf32, #tpu.memory_space<vmem>>, %arg11: memref<4x8x512xf32, #tpu.memory_space<vmem>>) attributes {dimension_semantics = [#tpu.dimension_semantics<parallel>, #tpu.dimension_semantics<arbitrary>], iteration_bounds = array<i64: 2, 2>, scalar_prefetch = 0 : i64, scratch_operands = 3 : i64, tpu.core_type = #tpu.core_type<tc>, window_params = [{transform_indices = @transform_0, window_bounds = array<i64: 1, 4, 8, 64>}, {transform_indices = @transform_1, window_bounds = array<i64: 1, 64, 512>}, {transform_indices = @transform_2, window_bounds = array<i64: 1, 128, 512>}, {transform_indices = @transform_3, window_bounds = array<i64: 1, 1, 512>}, {transform_indices = @transform_4, window_bounds = array<i64: 1, 4, 8, 128>}, {transform_indices = @transform_5, window_bounds = array<i64: 1, 8, 128>}, {transform_indices = @transform_6, window_bounds = array<i64: 1, 8, 128>}]} {
    %c1_i32 = arith.constant 1 : i32
    %0 = arith.cmpi eq, %arg0, %c1_i32 : i32
    %c6_i32 = arith.constant 6 : i32
    %c8_i32 = arith.constant 8 : i32
    %1 = arith.select %0, %c6_i32, %c8_i32 : i32
    %c4_i32 = arith.constant 4 : i32
    %2 = arith.muli %arg1, %c4_i32 : i32
    %c0_i32 = arith.constant 0 : i32
    %3 = arith.cmpi eq, %arg1, %c0_i32 : i32
    %4 = arith.extui %3 : i1 to i32
    %c0_i32_0 = arith.constant 0 : i32
    %5 = arith.cmpi ne, %4, %c0_i32_0 : i32
    scf.if %5 {
      %cst = arith.constant 0.000000e+00 : f32
      %15 = vector.broadcast %cst : f32 to vector<8x128xf32>
      %c0 = arith.constant 0 : index
      %c0_5 = arith.constant 0 : index
      %16 = vector.load %arg9[%c0, %c0_5] : memref<8x128xf32, #tpu.memory_space<vmem>>, vector<8x128xf32>
      tpu.vector_store %arg9[%c0, %c0_5], %15 {strides = array<i32>} : memref<8x128xf32, #tpu.memory_space<vmem>>, vector<8x128xf32>,
      %cst_6 = arith.constant 0.000000e+00 : f32
      %17 = vector.broadcast %cst_6 : f32 to vector<8x128xf32>
      %c0_7 = arith.constant 0 : index
      %c0_8 = arith.constant 0 : index
      %18 = vector.load %arg10[%c0_7, %c0_8] : memref<8x128xf32, #tpu.memory_space<vmem>>, vector<8x128xf32>
      tpu.vector_store %arg10[%c0_7, %c0_8], %17 {strides = array<i32>} : memref<8x128xf32, #tpu.memory_space<vmem>>, vector<8x128xf32>,
    } else {
    }
    %6 = arith.cmpi slt, %2, %1 : i32
    %7 = arith.extui %6 : i1 to i32
    %c0_i32_1 = arith.constant 0 : i32
    %8 = arith.cmpi ne, %7, %c0_i32_1 : i32
    scf.if %8 {
      %c0 = arith.constant 0 : index
      %c0_5 = arith.constant 0 : index
      %c0_6 = arith.constant 0 : index
      %c0_7 = arith.constant 0 : index
      %15 = vector.load %arg2[%c0, %c0_5, %c0_6, %c0_7] : memref<1x4x8x64xbf16, #tpu.memory_space<vmem>>, vector<1x4x8x64xbf16>
      %16 = vector.shape_cast %15 : vector<1x4x8x64xbf16> to vector<4x8x64xbf16>
      %17 = vector.shape_cast %16 : vector<4x8x64xbf16> to vector<32x64xbf16>
      %c0_8 = arith.constant 0 : index
      %c0_9 = arith.constant 0 : index
      %c0_10 = arith.constant 0 : index
      %18 = vector.load %arg3[%c0_8, %c0_9, %c0_10] : memref<1x64x512xbf16, #tpu.memory_space<vmem>>, vector<1x64x512xbf16>
      %19 = vector.shape_cast %18 : vector<1x64x512xbf16> to vector<64x512xbf16>
      %cst = arith.constant dense<0.000000e+00> : vector<32x512xf32>
      %20 = tpu.matmul %17, %19, %cst {dimension_numbers = #tpu.dot_dimension_numbers<[1], [0], [0], [1], [0, 0, 1, 1], [], []>} : vector<32x64xbf16>, vector<64x512xbf16>, vector<32x512xf32> -> vector<32x512xf32>
      %21 = vector.shape_cast %20 : vector<32x512xf32> to vector<4x8x512xf32>
      %c0_11 = arith.constant 0 : index
      %c0_12 = arith.constant 0 : index
      %c0_13 = arith.constant 0 : index
      %22 = vector.load %arg5[%c0_11, %c0_12, %c0_13] : memref<1x1x512xf32, #tpu.memory_space<vmem>>, vector<1x1x512xf32>
      %23 = vector.shape_cast %22 : vector<1x1x512xf32> to vector<1x512xf32>
      %24 = vector.shape_cast %23 : vector<1x512xf32> to vector<1x1x512xf32>
      %25 = vector.broadcast %24 : vector<1x1x512xf32> to vector<4x8x512xf32>
      %26 = arith.addf %21, %25 : vector<4x8x512xf32>
      %c0_14 = arith.constant 0 : index
      %c0_15 = arith.constant 0 : index
      %c0_16 = arith.constant 0 : index
      %27 = vector.load %arg11[%c0_14, %c0_15, %c0_16] : memref<4x8x512xf32, #tpu.memory_space<vmem>>, vector<4x8x512xf32>
      tpu.vector_store %arg11[%c0_14, %c0_15, %c0_16], %26 {strides = array<i32>} : memref<4x8x512xf32, #tpu.memory_space<vmem>>, vector<4x8x512xf32>,
      %c0_17 = arith.constant 0 : index
      %c0_18 = arith.constant 0 : index
      %c0_19 = arith.constant 0 : index
      %28 = vector.load %arg4[%c0_17, %c0_18, %c0_19] : memref<1x128x512xbf16, #tpu.memory_space<vmem>>, vector<1x128x512xbf16>
      %29 = vector.shape_cast %28 : vector<1x128x512xbf16> to vector<128x512xbf16>
      %c0_20 = arith.constant 0 : index
      %c0_21 = arith.constant 0 : index
      %30 = vector.load %arg9[%c0_20, %c0_21] : memref<8x128xf32, #tpu.memory_space<vmem>>, vector<8x128xf32>
      %c0_22 = arith.constant 0 : index
      %c0_23 = arith.constant 0 : index
      %31 = vector.load %arg10[%c0_22, %c0_23] : memref<8x128xf32, #tpu.memory_space<vmem>>, vector<8x128xf32>
      %c0_i32_24 = arith.constant 0 : i32
      %32 = arith.truncf %30 : vector<8x128xf32> to vector<8x128xbf16>
      %cst_25 = arith.constant dense<0.000000e+00> : vector<8x512xf32>
      %33 = tpu.matmul %32, %29, %cst_25 {dimension_numbers = #tpu.dot_dimension_numbers<[1], [0], [0], [1], [0, 0, 1, 1], [], []>} : vector<8x128xbf16>, vector<128x512xbf16>, vector<8x512xf32> -> vector<8x512xf32>
      %34 = arith.index_cast %c0_i32_24 : i32 to index
      %c0_26 = arith.constant 0 : index
      %c0_27 = arith.constant 0 : index
      %35 = vector.load %arg11[%34, %c0_26, %c0_27] : memref<4x8x512xf32, #tpu.memory_space<vmem>>, vector<1x8x512xf32>
      %36 = vector.shape_cast %35 : vector<1x8x512xf32> to vector<8x512xf32>
      %37 = arith.addf %33, %36 : vector<8x512xf32>
      %38 = vector.extract_strided_slice %37 {offsets = [0, 0], sizes = [8, 128], strides = [1, 1]} : vector<8x512xf32> to vector<8x128xf32>
      %39 = arith.negf %38 : vector<8x128xf32>
      %40 = math.exp %39 : vector<8x128xf32>
      %cst_28 = arith.constant 1.000000e+00 : f32
      %41 = vector.broadcast %cst_28 : f32 to vector<8x128xf32>
      %42 = arith.addf %41, %40 : vector<8x128xf32>
      %43 = arith.divf %41, %42 : vector<8x128xf32>
      %44 = vector.extract_strided_slice %37 {offsets = [0, 128], sizes = [8, 128], strides = [1, 1]} : vector<8x512xf32> to vector<8x128xf32>
      %45 = arith.negf %44 : vector<8x128xf32>
      %46 = math.exp %45 : vector<8x128xf32>
      %cst_29 = arith.constant 1.000000e+00 : f32
      %47 = vector.broadcast %cst_29 : f32 to vector<8x128xf32>
      %48 = arith.addf %47, %46 : vector<8x128xf32>
      %49 = arith.divf %47, %48 : vector<8x128xf32>
      %50 = vector.extract_strided_slice %37 {offsets = [0, 256], sizes = [8, 128], strides = [1, 1]} : vector<8x512xf32> to vector<8x128xf32>
      %51 = math.tanh %50 : vector<8x128xf32>
      %52 = vector.extract_strided_slice %37 {offsets = [0, 384], sizes = [8, 128], strides = [1, 1]} : vector<8x512xf32> to vector<8x128xf32>
      %53 = arith.negf %52 : vector<8x128xf32>
      %54 = math.exp %53 : vector<8x128xf32>
      %cst_30 = arith.constant 1.000000e+00 : f32
      %55 = vector.broadcast %cst_30 : f32 to vector<8x128xf32>
      %56 = arith.addf %55, %54 : vector<8x128xf32>
      %57 = arith.divf %55, %56 : vector<8x128xf32>
      %58 = arith.mulf %49, %31 : vector<8x128xf32>
      %59 = arith.mulf %43, %51 : vector<8x128xf32>
      %60 = arith.addf %58, %59 : vector<8x128xf32>
      %61 = math.tanh %60 : vector<8x128xf32>
      %62 = arith.mulf %57, %61 : vector<8x128xf32>
      %63 = arith.addi %2, %c0_i32_24 : i32
      %64 = arith.cmpi slt, %63, %1 : i32
      %cst_31 = arith.constant 0.000000e+00 : f32
      %65 = vector.broadcast %cst_31 : f32 to vector<8x128xf32>
      %66 = arith.select %64, %62, %65 : vector<8x128xf32>
      %c0_32 = arith.constant 0 : index
      %67 = arith.index_cast %c0_i32_24 : i32 to index
      %c0_33 = arith.constant 0 : index
      %c0_34 = arith.constant 0 : index
      %68 = vector.load %arg6[%c0_32, %67, %c0_33, %c0_34] : memref<1x4x8x128xf32, #tpu.memory_space<vmem>>, vector<1x1x8x128xf32>
      %69 = vector.shape_cast %68 : vector<1x1x8x128xf32> to vector<8x128xf32>
      %70 = vector.shape_cast %66 : vector<8x128xf32> to vector<1x1x8x128xf32>
      tpu.vector_store %arg6[%c0_32, %67, %c0_33, %c0_34], %70 {strides = array<i32>} : memref<1x4x8x128xf32, #tpu.memory_space<vmem>>, vector<1x1x8x128xf32>,
      %71 = arith.select %64, %62, %30 : vector<8x128xf32>
      %72 = arith.select %64, %60, %31 : vector<8x128xf32>
      %c1_i32_35 = arith.constant 1 : i32
      %73 = arith.truncf %71 : vector<8x128xf32> to vector<8x128xbf16>
      %cst_36 = arith.constant dense<0.000000e+00> : vector<8x512xf32>
      %74 = tpu.matmul %73, %29, %cst_36 {dimension_numbers = #tpu.dot_dimension_numbers<[1], [0], [0], [1], [0, 0, 1, 1], [], []>} : vector<8x128xbf16>, vector<128x512xbf16>, vector<8x512xf32> -> vector<8x512xf32>
      %75 = arith.index_cast %c1_i32_35 : i32 to index
      %c0_37 = arith.constant 0 : index
      %c0_38 = arith.constant 0 : index
      %76 = vector.load %arg11[%75, %c0_37, %c0_38] : memref<4x8x512xf32, #tpu.memory_space<vmem>>, vector<1x8x512xf32>
      %77 = vector.shape_cast %76 : vector<1x8x512xf32> to vector<8x512xf32>
      %78 = arith.addf %74, %77 : vector<8x512xf32>
      %79 = vector.extract_strided_slice %78 {offsets = [0, 0], sizes = [8, 128], strides = [1, 1]} : vector<8x512xf32> to vector<8x128xf32>
      %80 = arith.negf %79 : vector<8x128xf32>
      %81 = math.exp %80 : vector<8x128xf32>
      %cst_39 = arith.constant 1.000000e+00 : f32
      %82 = vector.broadcast %cst_39 : f32 to vector<8x128xf32>
      %83 = arith.addf %82, %81 : vector<8x128xf32>
      %84 = arith.divf %82, %83 : vector<8x128xf32>
      %85 = vector.extract_strided_slice %78 {offsets = [0, 128], sizes = [8, 128], strides = [1, 1]} : vector<8x512xf32> to vector<8x128xf32>
      %86 = arith.negf %85 : vector<8x128xf32>
      %87 = math.exp %86 : vector<8x128xf32>
      %cst_40 = arith.constant 1.000000e+00 : f32
      %88 = vector.broadcast %cst_40 : f32 to vector<8x128xf32>
      %89 = arith.addf %88, %87 : vector<8x128xf32>
      %90 = arith.divf %88, %89 : vector<8x128xf32>
      %91 = vector.extract_strided_slice %78 {offsets = [0, 256], sizes = [8, 128], strides = [1, 1]} : vector<8x512xf32> to vector<8x128xf32>
      %92 = math.tanh %91 : vector<8x128xf32>
      %93 = vector.extract_strided_slice %78 {offsets = [0, 384], sizes = [8, 128], strides = [1, 1]} : vector<8x512xf32> to vector<8x128xf32>
      %94 = arith.negf %93 : vector<8x128xf32>
      %95 = math.exp %94 : vector<8x128xf32>
      %cst_41 = arith.constant 1.000000e+00 : f32
      %96 = vector.broadcast %cst_41 : f32 to vector<8x128xf32>
      %97 = arith.addf %96, %95 : vector<8x128xf32>
      %98 = arith.divf %96, %97 : vector<8x128xf32>
      %99 = arith.mulf %90, %72 : vector<8x128xf32>
      %100 = arith.mulf %84, %92 : vector<8x128xf32>
      %101 = arith.addf %99, %100 : vector<8x128xf32>
      %102 = math.tanh %101 : vector<8x128xf32>
      %103 = arith.mulf %98, %102 : vector<8x128xf32>
      %104 = arith.addi %2, %c1_i32_35 : i32
      %105 = arith.cmpi slt, %104, %1 : i32
      %cst_42 = arith.constant 0.000000e+00 : f32
      %106 = vector.broadcast %cst_42 : f32 to vector<8x128xf32>
      %107 = arith.select %105, %103, %106 : vector<8x128xf32>
      %c0_43 = arith.constant 0 : index
      %108 = arith.index_cast %c1_i32_35 : i32 to index
      %c0_44 = arith.constant 0 : index
      %c0_45 = arith.constant 0 : index
      %109 = vector.load %arg6[%c0_43, %108, %c0_44, %c0_45] : memref<1x4x8x128xf32, #tpu.memory_space<vmem>>, vector<1x1x8x128xf32>
      %110 = vector.shape_cast %109 : vector<1x1x8x128xf32> to vector<8x128xf32>
      %111 = vector.shape_cast %107 : vector<8x128xf32> to vector<1x1x8x128xf32>
      tpu.vector_store %arg6[%c0_43, %108, %c0_44, %c0_45], %111 {strides = array<i32>} : memref<1x4x8x128xf32, #tpu.memory_space<vmem>>, vector<1x1x8x128xf32>,
      %112 = arith.select %105, %103, %71 : vector<8x128xf32>
      %113 = arith.select %105, %101, %72 : vector<8x128xf32>
      %c2_i32 = arith.constant 2 : i32
      %114 = arith.truncf %112 : vector<8x128xf32> to vector<8x128xbf16>
      %cst_46 = arith.constant dense<0.000000e+00> : vector<8x512xf32>
      %115 = tpu.matmul %114, %29, %cst_46 {dimension_numbers = #tpu.dot_dimension_numbers<[1], [0], [0], [1], [0, 0, 1, 1], [], []>} : vector<8x128xbf16>, vector<128x512xbf16>, vector<8x512xf32> -> vector<8x512xf32>
      %116 = arith.index_cast %c2_i32 : i32 to index
      %c0_47 = arith.constant 0 : index
      %c0_48 = arith.constant 0 : index
      %117 = vector.load %arg11[%116, %c0_47, %c0_48] : memref<4x8x512xf32, #tpu.memory_space<vmem>>, vector<1x8x512xf32>
      %118 = vector.shape_cast %117 : vector<1x8x512xf32> to vector<8x512xf32>
      %119 = arith.addf %115, %118 : vector<8x512xf32>
      %120 = vector.extract_strided_slice %119 {offsets = [0, 0], sizes = [8, 128], strides = [1, 1]} : vector<8x512xf32> to vector<8x128xf32>
      %121 = arith.negf %120 : vector<8x128xf32>
      %122 = math.exp %121 : vector<8x128xf32>
      %cst_49 = arith.constant 1.000000e+00 : f32
      %123 = vector.broadcast %cst_49 : f32 to vector<8x128xf32>
      %124 = arith.addf %123, %122 : vector<8x128xf32>
      %125 = arith.divf %123, %124 : vector<8x128xf32>
      %126 = vector.extract_strided_slice %119 {offsets = [0, 128], sizes = [8, 128], strides = [1, 1]} : vector<8x512xf32> to vector<8x128xf32>
      %127 = arith.negf %126 : vector<8x128xf32>
      %128 = math.exp %127 : vector<8x128xf32>
      %cst_50 = arith.constant 1.000000e+00 : f32
      %129 = vector.broadcast %cst_50 : f32 to vector<8x128xf32>
      %130 = arith.addf %129, %128 : vector<8x128xf32>
      %131 = arith.divf %129, %130 : vector<8x128xf32>
      %132 = vector.extract_strided_slice %119 {offsets = [0, 256], sizes = [8, 128], strides = [1, 1]} : vector<8x512xf32> to vector<8x128xf32>
      %133 = math.tanh %132 : vector<8x128xf32>
      %134 = vector.extract_strided_slice %119 {offsets = [0, 384], sizes = [8, 128], strides = [1, 1]} : vector<8x512xf32> to vector<8x128xf32>
      %135 = arith.negf %134 : vector<8x128xf32>
      %136 = math.exp %135 : vector<8x128xf32>
      %cst_51 = arith.constant 1.000000e+00 : f32
      %137 = vector.broadcast %cst_51 : f32 to vector<8x128xf32>
      %138 = arith.addf %137, %136 : vector<8x128xf32>
      %139 = arith.divf %137, %138 : vector<8x128xf32>
      %140 = arith.mulf %131, %113 : vector<8x128xf32>
      %141 = arith.mulf %125, %133 : vector<8x128xf32>
      %142 = arith.addf %140, %141 : vector<8x128xf32>
      %143 = math.tanh %142 : vector<8x128xf32>
      %144 = arith.mulf %139, %143 : vector<8x128xf32>
      %145 = arith.addi %2, %c2_i32 : i32
      %146 = arith.cmpi slt, %145, %1 : i32
      %cst_52 = arith.constant 0.000000e+00 : f32
      %147 = vector.broadcast %cst_52 : f32 to vector<8x128xf32>
      %148 = arith.select %146, %144, %147 : vector<8x128xf32>
      %c0_53 = arith.constant 0 : index
      %149 = arith.index_cast %c2_i32 : i32 to index
      %c0_54 = arith.constant 0 : index
      %c0_55 = arith.constant 0 : index
      %150 = vector.load %arg6[%c0_53, %149, %c0_54, %c0_55] : memref<1x4x8x128xf32, #tpu.memory_space<vmem>>, vector<1x1x8x128xf32>
      %151 = vector.shape_cast %150 : vector<1x1x8x128xf32> to vector<8x128xf32>
      %152 = vector.shape_cast %148 : vector<8x128xf32> to vector<1x1x8x128xf32>
      tpu.vector_store %arg6[%c0_53, %149, %c0_54, %c0_55], %152 {strides = array<i32>} : memref<1x4x8x128xf32, #tpu.memory_space<vmem>>, vector<1x1x8x128xf32>,
      %153 = arith.select %146, %144, %112 : vector<8x128xf32>
      %154 = arith.select %146, %142, %113 : vector<8x128xf32>
      %c3_i32 = arith.constant 3 : i32
      %155 = arith.truncf %153 : vector<8x128xf32> to vector<8x128xbf16>
      %cst_56 = arith.constant dense<0.000000e+00> : vector<8x512xf32>
      %156 = tpu.matmul %155, %29, %cst_56 {dimension_numbers = #tpu.dot_dimension_numbers<[1], [0], [0], [1], [0, 0, 1, 1], [], []>} : vector<8x128xbf16>, vector<128x512xbf16>, vector<8x512xf32> -> vector<8x512xf32>
      %157 = arith.index_cast %c3_i32 : i32 to index
      %c0_57 = arith.constant 0 : index
      %c0_58 = arith.constant 0 : index
      %158 = vector.load %arg11[%157, %c0_57, %c0_58] : memref<4x8x512xf32, #tpu.memory_space<vmem>>, vector<1x8x512xf32>
      %159 = vector.shape_cast %158 : vector<1x8x512xf32> to vector<8x512xf32>
      %160 = arith.addf %156, %159 : vector<8x512xf32>
      %161 = vector.extract_strided_slice %160 {offsets = [0, 0], sizes = [8, 128], strides = [1, 1]} : vector<8x512xf32> to vector<8x128xf32>
      %162 = arith.negf %161 : vector<8x128xf32>
      %163 = math.exp %162 : vector<8x128xf32>
      %cst_59 = arith.constant 1.000000e+00 : f32
      %164 = vector.broadcast %cst_59 : f32 to vector<8x128xf32>
      %165 = arith.addf %164, %163 : vector<8x128xf32>
      %166 = arith.divf %164, %165 : vector<8x128xf32>
      %167 = vector.extract_strided_slice %160 {offsets = [0, 128], sizes = [8, 128], strides = [1, 1]} : vector<8x512xf32> to vector<8x128xf32>
      %168 = arith.negf %167 : vector<8x128xf32>
      %169 = math.exp %168 : vector<8x128xf32>
      %cst_60 = arith.constant 1.000000e+00 : f32
      %170 = vector.broadcast %cst_60 : f32 to vector<8x128xf32>
      %171 = arith.addf %170, %169 : vector<8x128xf32>
      %172 = arith.divf %170, %171 : vector<8x128xf32>
      %173 = vector.extract_strided_slice %160 {offsets = [0, 256], sizes = [8, 128], strides = [1, 1]} : vector<8x512xf32> to vector<8x128xf32>
      %174 = math.tanh %173 : vector<8x128xf32>
      %175 = vector.extract_strided_slice %160 {offsets = [0, 384], sizes = [8, 128], strides = [1, 1]} : vector<8x512xf32> to vector<8x128xf32>
      %176 = arith.negf %175 : vector<8x128xf32>
      %177 = math.exp %176 : vector<8x128xf32>
      %cst_61 = arith.constant 1.000000e+00 : f32
      %178 = vector.broadcast %cst_61 : f32 to vector<8x128xf32>
      %179 = arith.addf %178, %177 : vector<8x128xf32>
      %180 = arith.divf %178, %179 : vector<8x128xf32>
      %181 = arith.mulf %172, %154 : vector<8x128xf32>
      %182 = arith.mulf %166, %174 : vector<8x128xf32>
      %183 = arith.addf %181, %182 : vector<8x128xf32>
      %184 = math.tanh %183 : vector<8x128xf32>
      %185 = arith.mulf %180, %184 : vector<8x128xf32>
      %186 = arith.addi %2, %c3_i32 : i32
      %187 = arith.cmpi slt, %186, %1 : i32
      %cst_62 = arith.constant 0.000000e+00 : f32
      %188 = vector.broadcast %cst_62 : f32 to vector<8x128xf32>
      %189 = arith.select %187, %185, %188 : vector<8x128xf32>
      %c0_63 = arith.constant 0 : index
      %190 = arith.index_cast %c3_i32 : i32 to index
      %c0_64 = arith.constant 0 : index
      %c0_65 = arith.constant 0 : index
      %191 = vector.load %arg6[%c0_63, %190, %c0_64, %c0_65] : memref<1x4x8x128xf32, #tpu.memory_space<vmem>>, vector<1x1x8x128xf32>
      %192 = vector.shape_cast %191 : vector<1x1x8x128xf32> to vector<8x128xf32>
      %193 = vector.shape_cast %189 : vector<8x128xf32> to vector<1x1x8x128xf32>
      tpu.vector_store %arg6[%c0_63, %190, %c0_64, %c0_65], %193 {strides = array<i32>} : memref<1x4x8x128xf32, #tpu.memory_space<vmem>>, vector<1x1x8x128xf32>,
      %194 = arith.select %187, %185, %153 : vector<8x128xf32>
      %195 = arith.select %187, %183, %154 : vector<8x128xf32>
      %c4_i32_66 = arith.constant 4 : i32
      %c0_67 = arith.constant 0 : index
      %c0_68 = arith.constant 0 : index
      %196 = vector.load %arg9[%c0_67, %c0_68] : memref<8x128xf32, #tpu.memory_space<vmem>>, vector<8x128xf32>
      tpu.vector_store %arg9[%c0_67, %c0_68], %194 {strides = array<i32>} : memref<8x128xf32, #tpu.memory_space<vmem>>, vector<8x128xf32>,
      %c0_69 = arith.constant 0 : index
      %c0_70 = arith.constant 0 : index
      %197 = vector.load %arg10[%c0_69, %c0_70] : memref<8x128xf32, #tpu.memory_space<vmem>>, vector<8x128xf32>
      tpu.vector_store %arg10[%c0_69, %c0_70], %195 {strides = array<i32>} : memref<8x128xf32, #tpu.memory_space<vmem>>, vector<8x128xf32>,
    } else {
    }
    %9 = arith.cmpi sge, %2, %1 : i32
    %10 = arith.extui %9 : i1 to i32
    %c0_i32_2 = arith.constant 0 : i32
    %11 = arith.cmpi ne, %10, %c0_i32_2 : i32
    scf.if %11 {
      %cst = arith.constant 0.000000e+00 : f32
      %15 = vector.broadcast %cst : f32 to vector<1x4x8x128xf32>
      %c0 = arith.constant 0 : index
      %c0_5 = arith.constant 0 : index
      %c0_6 = arith.constant 0 : index
      %c0_7 = arith.constant 0 : index
      %16 = vector.load %arg6[%c0, %c0_5, %c0_6, %c0_7] : memref<1x4x8x128xf32, #tpu.memory_space<vmem>>, vector<1x4x8x128xf32>
      tpu.vector_store %arg6[%c0, %c0_5, %c0_6, %c0_7], %15 {strides = array<i32>} : memref<1x4x8x128xf32, #tpu.memory_space<vmem>>, vector<1x4x8x128xf32>,
    } else {
    }
    %c1_i32_3 = arith.constant 1 : i32
    %12 = arith.cmpi eq, %arg1, %c1_i32_3 : i32
    %13 = arith.extui %12 : i1 to i32
    %c0_i32_4 = arith.constant 0 : i32
    %14 = arith.cmpi ne, %13, %c0_i32_4 : i32
    scf.if %14 {
      %c0 = arith.constant 0 : index
      %c0_5 = arith.constant 0 : index
      %15 = vector.load %arg9[%c0, %c0_5] : memref<8x128xf32, #tpu.memory_space<vmem>>, vector<8x128xf32>
      %c0_6 = arith.constant 0 : index
      %c0_7 = arith.constant 0 : index
      %c0_8 = arith.constant 0 : index
      %16 = vector.load %arg7[%c0_6, %c0_7, %c0_8] : memref<1x8x128xf32, #tpu.memory_space<vmem>>, vector<1x8x128xf32>
      %17 = vector.shape_cast %16 : vector<1x8x128xf32> to vector<8x128xf32>
      %18 = vector.shape_cast %15 : vector<8x128xf32> to vector<1x8x128xf32>
      tpu.vector_store %arg7[%c0_6, %c0_7, %c0_8], %18 {strides = array<i32>} : memref<1x8x128xf32, #tpu.memory_space<vmem>>, vector<1x8x128xf32>,
      %c0_9 = arith.constant 0 : index
      %c0_10 = arith.constant 0 : index
      %19 = vector.load %arg10[%c0_9, %c0_10] : memref<8x128xf32, #tpu.memory_space<vmem>>, vector<8x128xf32>
      %c0_11 = arith.constant 0 : index
      %c0_12 = arith.constant 0 : index
      %c0_13 = arith.constant 0 : index
      %20 = vector.load %arg8[%c0_11, %c0_12, %c0_13] : memref<1x8x128xf32, #tpu.memory_space<vmem>>, vector<1x8x128xf32>
      %21 = vector.shape_cast %20 : vector<1x8x128xf32> to vector<8x128xf32>
      %22 = vector.shape_cast %19 : vector<8x128xf32> to vector<1x8x128xf32>
      tpu.vector_store %arg8[%c0_11, %c0_12, %c0_13], %22 {strides = array<i32>} : memref<1x8x128xf32, #tpu.memory_space<vmem>>, vector<1x8x128xf32>,
    } else {
    }
    return
  }
  func.func @transform_0(%arg0: i32, %arg1: i32) -> (i32, i32, i32, i32) {
    %c0_i32 = arith.constant 0 : i32
    %c0_i32_0 = arith.constant 0 : i32
    %c0_i32_1 = arith.constant 0 : i32
    return %arg0, %arg1, %c0_i32, %c0_i32_0 : i32, i32, i32, i32
  }
  func.func @transform_1(%arg0: i32, %arg1: i32) -> (i32, i32, i32) {
    %c0_i32 = arith.constant 0 : i32
    %c0_i32_0 = arith.constant 0 : i32
    %c0_i32_1 = arith.constant 0 : i32
    return %arg0, %c0_i32, %c0_i32_0 : i32, i32, i32
  }
  func.func @transform_2(%arg0: i32, %arg1: i32) -> (i32, i32, i32) {
    %c0_i32 = arith.constant 0 : i32
    %c0_i32_0 = arith.constant 0 : i32
    %c0_i32_1 = arith.constant 0 : i32
    return %arg0, %c0_i32, %c0_i32_0 : i32, i32, i32
  }
  func.func @transform_3(%arg0: i32, %arg1: i32) -> (i32, i32, i32) {
    %c0_i32 = arith.constant 0 : i32
    %c0_i32_0 = arith.constant 0 : i32
    %c0_i32_1 = arith.constant 0 : i32
    return %arg0, %c0_i32, %c0_i32_0 : i32, i32, i32
  }
  func.func @transform_4(%arg0: i32, %arg1: i32) -> (i32, i32, i32, i32) {
    %c0_i32 = arith.constant 0 : i32
    %c0_i32_0 = arith.constant 0 : i32
    %c0_i32_1 = arith.constant 0 : i32
    return %arg0, %arg1, %c0_i32, %c0_i32_0 : i32, i32, i32, i32
  }
  func.func @transform_5(%arg0: i32, %arg1: i32) -> (i32, i32, i32) {
    %c0_i32 = arith.constant 0 : i32
    %c0_i32_0 = arith.constant 0 : i32
    %c0_i32_1 = arith.constant 0 : i32
    return %arg0, %c0_i32, %c0_i32_0 : i32, i32, i32
  }
  func.func @transform_6(%arg0: i32, %arg1: i32) -> (i32, i32, i32) {
    %c0_i32 = arith.constant 0 : i32
    %c0_i32_0 = arith.constant 0 : i32
    %c0_i32_1 = arith.constant 0 : i32
    return %arg0, %c0_i32, %c0_i32_0 : i32, i32, i32
  }
}

</mosaic_0001>

<llo_original>
// kernel: tpu_custom_call.1
$region0: #{tpu_custom_call.1}
  #allocation0 [shape = 'u32[]', space=smem, size = 0x4, offset = 0x4, fixed_abs, tag = 'smem constant byte address 0x4 - core index']
  #allocation1 [shape = 'u32[144,128]{1,0:T(1,128)}', space=vmem, size = 0x12000, scoped, tag = 'internal scratch']
  #allocation2 [shape = 'f32[8,128]{1,0:T(8,128)}', space=vmem, size = 0x1000, scoped, tag = 'scratch operand']
  #allocation3 [shape = 'f32[8,128]{1,0:T(8,128)}', space=vmem, size = 0x1000, scoped, tag = 'scratch operand']
  #allocation4 [shape = 'f32[4,8,512]{2,1,0:T(8,128)}', space=vmem, size = 0x10000, scoped, tag = 'scratch operand']
  %s0 = inlined_call_operand.hbm [shape: bf16[2,8,8,64], index: 0, kind: input, shape index: {}]
  %s1 = inlined_call_operand.hbm [shape: bf16[2,64,512], index: 1, kind: input, shape index: {}]
  %s2 = inlined_call_operand.hbm [shape: bf16[2,128,512], index: 2, kind: input, shape index: {}]
  %s3 = inlined_call_operand.hbm [shape: f32[2,1,512], index: 3, kind: input, shape index: {}]
  %s4 = inlined_call_operand.hbm [shape: f32[2,8,8,128], index: 4, kind: output, shape index: {0}]
  %s5 = inlined_call_operand.hbm [shape: f32[2,8,128], index: 5, kind: output, shape index: {1}]
  %s6 = inlined_call_operand.hbm [shape: f32[2,8,128], index: 6, kind: output, shape index: {2}]
  %7 = xla_tuple %s4, %s5, %s6
  %s8 = sld [smem:[#allocation0]]
  $region97: #{tpu_custom_call.1} parent=0
    _
  %s10 = ssub.s32 1, %s8
  %s11 = scalar_select 0, %s10, %s8
  $region1: #{tpu_custom_call.1} parent=0
    #allocation5 [shape = 'u8[16384]{0}', space=vmem, size = 0x4000, scoped, tag = 'input window, operand 0']
    #allocation6 [shape = 's32[2]{0}', space=sflag, size = 0x8, scoped, tag = 'scoped memory for tpu_custom_call.1']
    #allocation7 [shape = 's32[2]{0}', space=sflag, size = 0x8, scoped, tag = 'scoped memory for tpu_custom_call.1']
    #allocation8 [shape = 'u8[131072]{0}', space=vmem, size = 0x20000, scoped, tag = 'input window, operand 1']
    #allocation9 [shape = 's32[2]{0}', space=sflag, size = 0x8, scoped, tag = 'scoped memory for tpu_custom_call.1']
    #allocation10 [shape = 'u8[262144]{0}', space=vmem, size = 0x40000, scoped, tag = 'input window, operand 2']
    #allocation11 [shape = 'u8[4096]{0}', space=vmem, size = 0x1000, scoped, tag = 'input window, operand 3']
    #allocation12 [shape = 's32[2]{0}', space=sflag, size = 0x8, scoped, tag = 'scoped memory for tpu_custom_call.1']
    #allocation13 [shape = 'u8[32768]{0}', space=vmem, size = 0x8000, scoped, tag = 'output window, operand 0']
    #allocation14 [shape = 'u8[8192]{0}', space=vmem, size = 0x2000, scoped, tag = 'output window, operand 1']
    #allocation15 [shape = 's32[2]{0}', space=sflag, size = 0x8, scoped, tag = 'scoped memory for tpu_custom_call.1']
    #allocation16 [shape = 'u8[8192]{0}', space=vmem, size = 0x2000, scoped, tag = 'output window, operand 2']
    %12 = vsyncpa [#allocation6], 0
    %s13 = scalar_lea.sflag [#allocation6], 1
    %14 = vsyncpa %s13, 0
    %15 = vsyncpa [#allocation9], 0
    %s16 = scalar_lea.sflag [#allocation9], 1
    %17 = vsyncpa %s16, 0
    %18 = vsyncpa [#allocation12], 0
    %s19 = scalar_lea.sflag [#allocation12], 1
    %20 = vsyncpa %s19, 0
    %21 = vsyncpa [#allocation7], 0
    %s22 = scalar_lea.sflag [#allocation7], 1
    %23 = vsyncpa %s22, 0
    %24 = vsyncpa [#allocation15], 0
    %s25 = scalar_lea.sflag [#allocation15], 1
    %26 = vsyncpa %s25, 0
    loop: start=0, step=1, limit=6
    $region2: #{tpu_custom_call.1} parent=1 // loop_pre_header
      _
    $region3: #{tpu_custom_call.1} parent=1 // loop_header
      %s28 = sphi 0, %s32
      %p29 = scmp.ge.s32.totalorder %s28, 6
      %s35 = sphi 0, %s47
      %s36 = sphi 0, %s43
      %s37 = sphi 0, %s35
      %s38 = sphi 0, %s36
      %s39 = sphi 0, %s37
      %s40 = sphi 0, %s38
      %s52 = sphi 0, %s54
      %s55 = sphi 0, %s52
      %s56 = sphi 0, %s55
      %s72 = sphi 0, %s56
      %s78 = sphi 0, %s80
      %s81 = sphi 0, %s78
      %s82 = sphi 0, %s81
      %s98 = sphi 0, %s82
      %s104 = sphi 0, %s106
      %s107 = sphi 0, %s104
      %s108 = sphi 0, %s107
      %s124 = sphi 0, %s108
      %s130 = sphi 0, %s132
      %s133 = sphi 0, %s130
      %s134 = sphi 0, %s133
      %s150 = sphi 0, %s134
      %s158 = sphi 0, %s160
      %s161 = sphi 0, %s158
      %s162 = sphi 0, %s161
      %s178 = sphi 0, %s162
      %s184 = sphi 0, %s186
      %s187 = sphi 0, %s184
      %s188 = sphi 0, %s187
      %s204 = sphi 0, %s188
      %s210 = sphi 0, %s212
      %s213 = sphi 0, %s210
      %s214 = sphi 0, %s213
      %s230 = sphi 0, %s214
    $region4: #{tpu_custom_call.1} parent=1 // loop_header_branch
      %31 = sbr.rel (%p29) target = $region8
    $region5: #{tpu_custom_call.1} parent=1 // loop_body
      %s33 = ssub.s32 %s28, 1
      %s34 = ssub.s32 %s28, 2
      %s41 = sadd.s32 1, %s36
      %p42 = scmp.ge.s32.totalorder %s41, 2
      %s43 = scalar_select %p42, 0, %s41
      %s44 = sadd.s32 1, %s35
      %s45 = scalar_select %p42, %s44, %s35
      %p46 = scmp.ge.s32.totalorder %s45, 2
      %s47 = scalar_select %p46, 0, %s45
      %s48 = ssub.s32 %s35, %s47
      %s49 = ssub.s32 %s36, %s43
      %s50 = sor.u32 %s48, %s49
      %p51 = scmp.eq.s32.totalorder %s50, 0
      %s53 = sadd.s32 %s52, 1
      %s54 = scalar_select %p51, %s52, %s53
      %p57 = pneg %p51
      %p58 = scmp.eq.s32.totalorder %s28, 3
      %p59 = por %p57, %p58
      %p60 = scmp.ne.s32.totalorder %s52, %s55
      %p61 = scmp.eq.s32.totalorder %s28, 0
      %p62 = por %p60, %p61
      %p63 = scmp.ne.s32.totalorder %s52, %s55
      %p64 = scmp.eq.s32.totalorder %s33, 3
      %p65 = por %p63, %p64
      %p66 = scmp.ne.s32.totalorder %s55, %s56
      %p67 = scmp.eq.s32.totalorder %s33, 0
      %p68 = por %p66, %p67
      %p69 = scmp.ne.s32.totalorder %s55, %s56
      %p70 = scmp.eq.s32.totalorder %s34, 3
      %p71 = por %p69, %p70
      %p73 = scmp.ne.s32.totalorder %s56, %s72
      %p74 = scmp.eq.s32.totalorder %s34, 0
      %p75 = por %p73, %p74
      %s76 = ssub.s32 %s35, %s47
      %p77 = scmp.eq.s32.totalorder %s76, 0
      %s79 = sadd.s32 %s78, 1
      %s80 = scalar_select %p77, %s78, %s79
      %p83 = pneg %p77
      %p84 = scmp.eq.s32.totalorder %s28, 3
      %p85 = por %p83, %p84
      %p86 = scmp.ne.s32.totalorder %s78, %s81
      %p87 = scmp.eq.s32.totalorder %s28, 0
      %p88 = por %p86, %p87
      %p89 = scmp.ne.s32.totalorder %s78, %s81
      %p90 = scmp.eq.s32.totalorder %s33, 3
      %p91 = por %p89, %p90
      %p92 = scmp.ne.s32.totalorder %s81, %s82
      %p93 = scmp.eq.s32.totalorder %s33, 0
      %p94 = por %p92, %p93
      %p95 = scmp.ne.s32.totalorder %s81, %s82
      %p96 = scmp.eq.s32.totalorder %s34, 3
      %p97 = por %p95, %p96
      %p99 = scmp.ne.s32.totalorder %s82, %s98
      %p100 = scmp.eq.s32.totalorder %s34, 0
      %p101 = por %p99, %p100
      %s102 = ssub.s32 %s35, %s47
      %p103 = scmp.eq.s32.totalorder %s102, 0
      %s105 = sadd.s32 %s104, 1
      %s106 = scalar_select %p103, %s104, %s105
      %p109 = pneg %p103
      %p110 = scmp.eq.s32.totalorder %s28, 3
      %p111 = por %p109, %p110
      %p112 = scmp.ne.s32.totalorder %s104, %s107
      %p113 = scmp.eq.s32.totalorder %s28, 0
      %p114 = por %p112, %p113
      %p115 = scmp.ne.s32.totalorder %s104, %s107
      %p116 = scmp.eq.s32.totalorder %s33, 3
      %p117 = por %p115, %p116
      %p118 = scmp.ne.s32.totalorder %s107, %s108
      %p119 = scmp.eq.s32.totalorder %s33, 0
      %p120 = por %p118, %p119
      %p121 = scmp.ne.s32.totalorder %s107, %s108
      %p122 = scmp.eq.s32.totalorder %s34, 3
      %p123 = por %p121, %p122
      %p125 = scmp.ne.s32.totalorder %s108, %s124
      %p126 = scmp.eq.s32.totalorder %s34, 0
      %p127 = por %p125, %p126
      %s128 = ssub.s32 %s35, %s47
      %p129 = scmp.eq.s32.totalorder %s128, 0
      %s131 = sadd.s32 %s130, 1
      %s132 = scalar_select %p129, %s130, %s131
      %p135 = pneg %p129
      %p136 = scmp.eq.s32.totalorder %s28, 3
      %p137 = por %p135, %p136
      %p138 = scmp.ne.s32.totalorder %s130, %s133
      %p139 = scmp.eq.s32.totalorder %s28, 0
      %p140 = por %p138, %p139
      %p141 = scmp.ne.s32.totalorder %s130, %s133
      %p142 = scmp.eq.s32.totalorder %s33, 3
      %p143 = por %p141, %p142
      %p144 = scmp.ne.s32.totalorder %s133, %s134
      %p145 = scmp.eq.s32.totalorder %s33, 0
      %p146 = por %p144, %p145
      %p147 = scmp.ne.s32.totalorder %s133, %s134
      %p148 = scmp.eq.s32.totalorder %s34, 3
      %p149 = por %p147, %p148
      %p151 = scmp.ne.s32.totalorder %s134, %s150
      %p152 = scmp.eq.s32.totalorder %s34, 0
      %p153 = por %p151, %p152
      %s154 = ssub.s32 %s35, %s47
      %s155 = ssub.s32 %s36, %s43
      %s156 = sor.u32 %s154, %s155
      %p157 = scmp.eq.s32.totalorder %s156, 0
      %s159 = sadd.s32 %s158, 1
      %s160 = scalar_select %p157, %s158, %s159
      %p163 = pneg %p157
      %p164 = scmp.eq.s32.totalorder %s28, 3
      %p165 = por %p163, %p164
      %p166 = scmp.ne.s32.totalorder %s158, %s161
      %p167 = scmp.eq.s32.totalorder %s28, 0
      %p168 = por %p166, %p167
      %p169 = scmp.ne.s32.totalorder %s158, %s161
      %p170 = scmp.eq.s32.totalorder %s33, 3
      %p171 = por %p169, %p170
      %p172 = scmp.ne.s32.totalorder %s161, %s162
      %p173 = scmp.eq.s32.totalorder %s33, 0
      %p174 = por %p172, %p173
      %p175 = scmp.ne.s32.totalorder %s161, %s162
      %p176 = scmp.eq.s32.totalorder %s34, 3
      %p177 = por %p175, %p176
      %p179 = scmp.ne.s32.totalorder %s162, %s178
      %p180 = scmp.eq.s32.totalorder %s34, 0
      %p181 = por %p179, %p180
      %s182 = ssub.s32 %s35, %s47
      %p183 = scmp.eq.s32.totalorder %s182, 0
      %s185 = sadd.s32 %s184, 1
      %s186 = scalar_select %p183, %s184, %s185
      %p189 = pneg %p183
      %p190 = scmp.eq.s32.totalorder %s28, 3
      %p191 = por %p189, %p190
      %p192 = scmp.ne.s32.totalorder %s184, %s187
      %p193 = scmp.eq.s32.totalorder %s28, 0
      %p194 = por %p192, %p193
      %p195 = scmp.ne.s32.totalorder %s184, %s187
      %p196 = scmp.eq.s32.totalorder %s33, 3
      %p197 = por %p195, %p196
      %p198 = scmp.ne.s32.totalorder %s187, %s188
      %p199 = scmp.eq.s32.totalorder %s33, 0
      %p200 = por %p198, %p199
      %p201 = scmp.ne.s32.totalorder %s187, %s188
      %p202 = scmp.eq.s32.totalorder %s34, 3
      %p203 = por %p201, %p202
      %p205 = scmp.ne.s32.totalorder %s188, %s204
      %p206 = scmp.eq.s32.totalorder %s34, 0
      %p207 = por %p205, %p206
      %s208 = ssub.s32 %s35, %s47
      %p209 = scmp.eq.s32.totalorder %s208, 0
      %s211 = sadd.s32 %s210, 1
      %s212 = scalar_select %p209, %s210, %s211
      %p215 = pneg %p209
      %p216 = scmp.eq.s32.totalorder %s28, 3
      %p217 = por %p215, %p216
      %p218 = scmp.ne.s32.totalorder %s210, %s213
      %p219 = scmp.eq.s32.totalorder %s28, 0
      %p220 = por %p218, %p219
      %p221 = scmp.ne.s32.totalorder %s210, %s213
      %p222 = scmp.eq.s32.totalorder %s33, 3
      %p223 = por %p221, %p222
      %p224 = scmp.ne.s32.totalorder %s213, %s214
      %p225 = scmp.eq.s32.totalorder %s33, 0
      %p226 = por %p224, %p225
      %p227 = scmp.ne.s32.totalorder %s213, %s214
      %p228 = scmp.eq.s32.totalorder %s34, 3
      %p229 = por %p227, %p228
      %p231 = scmp.ne.s32.totalorder %s214, %s230
      %p232 = scmp.eq.s32.totalorder %s34, 0
      %p233 = por %p231, %p232
      %p234 = scmp.le.s32.totalorder 1, %s28
      %p235 = scmp.lt.s32.totalorder %s28, 5
      %p236 = pnand %p234, %p235
      %p237 = pneg %p236
      // Predicated region
      $region9: #{tpu_custom_call.1} parent=5 // pred_check
        _
      $region10: #{tpu_custom_call.1} parent=5 // pred_check_branch
        %239 = sbr.rel (%p236) target = $region12
      $region11: #{tpu_custom_call.1} parent=5 // pred_region
        %s240 = ssub.s32 %s28, 1
      $region12: #{tpu_custom_call.1} parent=5 // pred_fallthru
        _
      %p241 = scmp.lt.s32.totalorder %s28, 4
      // Predicated region
      $region13: #{tpu_custom_call.1} parent=5 // pred_check
        %p242 = pneg %p241
      $region14: #{tpu_custom_call.1} parent=5 // pred_check_branch
        %244 = sbr.rel (%p242) target = $region16
      $region15: #{tpu_custom_call.1} parent=5 // pred_region
        // Predicated region
        $region17: #{tpu_custom_call.1} parent=15 // pred_check
          %p245 = pneg %p62
        $region18: #{tpu_custom_call.1} parent=15 // pred_check_branch
          %247 = sbr.rel (%p245) target = $region20
        $region19: #{tpu_custom_call.1} parent=15 // pred_region
          %s248 = sand.u32 %s52, 1
          %s249 = scalar_lea.sflag [#allocation6], %s248
          %s250 = sand.u32 %s52, 1
          %s251 = smul.addr %s250, 16
          %s252 = scalar_lea.vmem [#allocation5], %s251
          %s253 = smul.u32 4, %s36
          %s255 = ssub.s32 256, 256
          %256 = vsyncadd %s249, %s255
          %s257 = smul.addr %s35, 8
          %s258 = sadd.s32 %s253, %s257
          %s259 = smul.addr %s258, 64
          %s260 = scalar_lea.hbm %s0, %s259
          %s261 = sshll.u32 %s252, 4
          %s262 = int_to_ptr.vmem [resolvable:$true] %s261
          %267 = dma.hbm_to_vmem [thread:$0]  %s260, 256, %s262, %s249, 64, 64, 4
        $region20: #{tpu_custom_call.1} parent=15 // pred_fallthru
          _
        // Predicated region
        $region21: #{tpu_custom_call.1} parent=15 // pred_check
          %p268 = pneg %p88
        $region22: #{tpu_custom_call.1} parent=15 // pred_check_branch
          %270 = sbr.rel (%p268) target = $region24
        $region23: #{tpu_custom_call.1} parent=15 // pred_region
          %s271 = sand.u32 %s28, 1
          %s272 = scalar_lea.sflag [#allocation9], %s271
          %s273 = sand.u32 %s78, 1
          %s274 = smul.addr %s273, 128
          %s275 = scalar_lea.vmem [#allocation8], %s274
          %s277 = ssub.s32 2048, 2048
          %278 = vsyncadd %s272, %s277
          %s279 = smul.addr %s35, 32
          %s280 = smul.addr %s279, 64
          %s281 = scalar_lea.hbm %s1, %s280
          %s282 = sshll.u32 %s275, 4
          %s283 = int_to_ptr.vmem [resolvable:$true] %s282
          %288 = dma.hbm_to_vmem [thread:$0]  %s281, 2048, %s283, %s272, 256, 256, 16
        $region24: #{tpu_custom_call.1} parent=15 // pred_fallthru
          _
        // Predicated region
        $region25: #{tpu_custom_call.1} parent=15 // pred_check
          %p289 = pneg %p114
        $region26: #{tpu_custom_call.1} parent=15 // pred_check_branch
          %291 = sbr.rel (%p289) target = $region28
        $region27: #{tpu_custom_call.1} parent=15 // pred_region
          %s292 = sand.u32 %s28, 1
          %s293 = scalar_lea.sflag [#allocation9], %s292
          %s294 = sand.u32 %s104, 1
          %s295 = smul.addr %s294, 256
          %s296 = scalar_lea.vmem [#allocation10], %s295
          %s298 = ssub.s32 4096, 4096
          %299 = vsyncadd %s293, %s298
          %s300 = smul.addr %s35, 64
          %s301 = smul.addr %s300, 64
          %s302 = scalar_lea.hbm %s2, %s301
          %s303 = sshll.u32 %s296, 4
          %s304 = int_to_ptr.vmem [resolvable:$true] %s303
          %309 = dma.hbm_to_vmem [thread:$0]  %s302, 4096, %s304, %s293, 256, 256, 16
        $region28: #{tpu_custom_call.1} parent=15 // pred_fallthru
          _
        // Predicated region
        $region29: #{tpu_custom_call.1} parent=15 // pred_check
          %p310 = pneg %p140
        $region30: #{tpu_custom_call.1} parent=15 // pred_check_branch
          %312 = sbr.rel (%p310) target = $region32
        $region31: #{tpu_custom_call.1} parent=15 // pred_region
          %s313 = sand.u32 %s130, 1
          %s314 = scalar_lea.sflag [#allocation12], %s313
          %s315 = sand.u32 %s130, 1
          %s316 = smul.addr %s315, 4
          %s317 = scalar_lea.vmem [#allocation11], %s316
          %s319 = ssub.s32 64, 64
          %320 = vsyncadd %s314, %s319
          %s321 = smul.addr %s35, 4
          %s322 = smul.addr %s321, 16
          %s323 = scalar_lea.hbm %s3, %s322
          %s325 = sshll.u32 %s317, 4
          %s326 = int_to_ptr.vmem [resolvable:$true] %s325
          %328 = dma.hbm_to_vmem [thread:$0]  %s323, 64, %s326, %s314
        $region32: #{tpu_custom_call.1} parent=15 // pred_fallthru
          _
      $region16: #{tpu_custom_call.1} parent=5 // pred_fallthru
        _
      %p329 = scmp.le.s32.totalorder 1, %s28
      %p330 = scmp.lt.s32.totalorder %s28, 5
      %p331 = pnand %p329, %p330
      %p332 = pneg %p331
      // Predicated region
      $region33: #{tpu_custom_call.1} parent=5 // pred_check
        _
      $region34: #{tpu_custom_call.1} parent=5 // pred_check_branch
        %334 = sbr.rel (%p331) target = $region36
      $region35: #{tpu_custom_call.1} parent=5 // pred_region
        %s335 = ssub.s32 %s28, 1
        %s336 = sand.u32 %s55, 1
        %s337 = scalar_lea.sflag [#allocation6], %s336
        %s338 = sand.u32 %s55, 1
        %s339 = smul.addr %s338, 16
        %s340 = scalar_lea.vmem [#allocation5], %s339
        // Predicated region
        $region37: #{tpu_custom_call.1} parent=35 // pred_check
          %p341 = pneg %p68
        $region38: #{tpu_custom_call.1} parent=35 // pred_check_branch
          %343 = sbr.rel (%p341) target = $region40
        $region39: #{tpu_custom_call.1} parent=35 // pred_region
          %344 = dma.done %s337, 256
        $region40: #{tpu_custom_call.1} parent=35 // pred_fallthru
          _
        %s345 = sand.u32 %s33, 1
        %s346 = scalar_lea.sflag [#allocation9], %s345
        %s347 = sand.u32 %s81, 1
        %s348 = smul.addr %s347, 128
        %s349 = scalar_lea.vmem [#allocation8], %s348
        // Predicated region
        $region41: #{tpu_custom_call.1} parent=35 // pred_check
          %p350 = pneg %p94
        $region42: #{tpu_custom_call.1} parent=35 // pred_check_branch
          %352 = sbr.rel (%p350) target = $region44
        $region43: #{tpu_custom_call.1} parent=35 // pred_region
          %353 = dma.done %s346, 2048
        $region44: #{tpu_custom_call.1} parent=35 // pred_fallthru
          _
        %s354 = sand.u32 %s33, 1
        %s355 = scalar_lea.sflag [#allocation9], %s354
        %s356 = sand.u32 %s107, 1
        %s357 = smul.addr %s356, 256
        %s358 = scalar_lea.vmem [#allocation10], %s357
        // Predicated region
        $region45: #{tpu_custom_call.1} parent=35 // pred_check
          %p359 = pneg %p120
        $region46: #{tpu_custom_call.1} parent=35 // pred_check_branch
          %361 = sbr.rel (%p359) target = $region48
        $region47: #{tpu_custom_call.1} parent=35 // pred_region
          %362 = dma.done %s355, 4096
        $region48: #{tpu_custom_call.1} parent=35 // pred_fallthru
          _
        %s363 = sand.u32 %s133, 1
        %s364 = scalar_lea.sflag [#allocation12], %s363
        %s365 = sand.u32 %s133, 1
        %s366 = smul.addr %s365, 4
        %s367 = scalar_lea.vmem [#allocation11], %s366
        // Predicated region
        $region49: #{tpu_custom_call.1} parent=35 // pred_check
          %p368 = pneg %p146
        $region50: #{tpu_custom_call.1} parent=35 // pred_check_branch
          %370 = sbr.rel (%p368) target = $region52
        $region51: #{tpu_custom_call.1} parent=35 // pred_region
          %371 = dma.done %s364, 64
        $region52: #{tpu_custom_call.1} parent=35 // pred_fallthru
          _
        %s372 = sand.u32 %s55, 1
        %s373 = scalar_lea.sflag [#allocation6], %s372
        %s374 = sand.u32 %s55, 1
        %s375 = smul.addr %s374, 16
        %s376 = scalar_lea.vmem [#allocation5], %s375
        %p377 = pneg %p68
        %p378 = pneg %p65
        %s379 = sand.u32 %s33, 1
        %s380 = scalar_lea.sflag [#allocation9], %s379
        %s381 = sand.u32 %s81, 1
        %s382 = smul.addr %s381, 128
        %s383 = scalar_lea.vmem [#allocation8], %s382
        %p384 = pneg %p94
        %p385 = pneg %p91
        %s386 = sand.u32 %s33, 1
        %s387 = scalar_lea.sflag [#allocation9], %s386
        %s388 = sand.u32 %s107, 1
        %s389 = smul.addr %s388, 256
        %s390 = scalar_lea.vmem [#allocation10], %s389
        %p391 = pneg %p120
        %p392 = pneg %p117
        %s393 = sand.u32 %s133, 1
        %s394 = scalar_lea.sflag [#allocation12], %s393
        %s395 = sand.u32 %s133, 1
        %s396 = smul.addr %s395, 4
        %s397 = scalar_lea.vmem [#allocation11], %s396
        %p398 = pneg %p146
        %p399 = pneg %p143
        %p400 = pneg %p174
        %p401 = pneg %p171
        %s402 = sand.u32 %s161, 1
        %s403 = scalar_lea.sflag [#allocation7], %s402
        %s404 = sand.u32 %s161, 1
        %s405 = smul.addr %s404, 32
        %s406 = scalar_lea.vmem [#allocation13], %s405
        %p407 = pneg %p200
        %p408 = pneg %p197
        %s409 = sand.u32 %s33, 1
        %s410 = scalar_lea.sflag [#allocation15], %s409
        %s411 = sand.u32 %s187, 1
        %s412 = smul.addr %s411, 8
        %s413 = scalar_lea.vmem [#allocation14], %s412
        %p414 = pneg %p226
        %p415 = pneg %p223
        %s416 = sand.u32 %s33, 1
        %s417 = scalar_lea.sflag [#allocation15], %s416
        %s418 = sand.u32 %s213, 1
        %s419 = smul.addr %s418, 8
        %s420 = scalar_lea.vmem [#allocation16], %s419
        %s421 = smul.u32 4, %s38
        %s422 = smul.u32 4, %s38
        %p424 = scmp.eq.s32.totalorder %s37, 1
        %s425 = scalar_select %p424, 6, 8
        %s426 = smul.u32 %s38, 4
        %p427 = scmp.eq.s32.totalorder %s38, 0
        // Predicated region
        $region53: #{tpu_custom_call.1} parent=35 // pred_check
          %p428 = pneg %p427
        $region54: #{tpu_custom_call.1} parent=35 // pred_check_branch
          %430 = sbr.rel (%p428) target = $region56
        $region55: #{tpu_custom_call.1} parent=35 // pred_region
          %431 = vst [vmem:[#allocation2] sm:$0xff] 0.0
          %432 = vst [vmem:[#allocation3] sm:$0xff] 0.0
        $region56: #{tpu_custom_call.1} parent=35 // pred_fallthru
          _
        %p433 = scmp.lt.s32.totalorder %s426, %s425
        // Predicated region
        $region57: #{tpu_custom_call.1} parent=35 // pred_check
          %p434 = pneg %p433
        $region58: #{tpu_custom_call.1} parent=35 // pred_check_branch
          %436 = sbr.rel (%p434) target = $region60
        $region59: #{tpu_custom_call.1} parent=35 // pred_region
          %v437 = vld [vmem:[%s340] sm:$0xf]
          %v438 = vld [vmem:[%s340 + $0x4] sm:$0xf]
          %v439 = vld [vmem:[%s340 + $0x8] sm:$0xf]
          %v440 = vld [vmem:[%s340 + $0xc] sm:$0xf]
          %v441 = vld [vmem:[%s349] sm:$0xff]
          %v442 = vld [vmem:[%s349 + $0x8] sm:$0xff]
          %v443 = vld [vmem:[%s349 + $0x10] sm:$0xff]
          %v444 = vld [vmem:[%s349 + $0x18] sm:$0xff]
          %v445 = vld [vmem:[%s349 + $0x20] sm:$0xff]
          %v446 = vld [vmem:[%s349 + $0x28] sm:$0xff]
          %v447 = vld [vmem:[%s349 + $0x30] sm:$0xff]
          %v448 = vld [vmem:[%s349 + $0x38] sm:$0xff]
          %v449 = vld [vmem:[%s349 + $0x40] sm:$0xff]
          %v450 = vld [vmem:[%s349 + $0x48] sm:$0xff]
          %v451 = vld [vmem:[%s349 + $0x50] sm:$0xff]
          %v452 = vld [vmem:[%s349 + $0x58] sm:$0xff]
          %v453 = vld [vmem:[%s349 + $0x60] sm:$0xff]
          %v454 = vld [vmem:[%s349 + $0x68] sm:$0xff]
          %v455 = vld [vmem:[%s349 + $0x70] sm:$0xff]
          %v456 = vld [vmem:[%s349 + $0x78] sm:$0xff]
          %v461 = vunpack.c.l.b16 %v437
          %v462 = vunpack.c.l.b16 %v438
          %v463 = vunpack.c.l.b16 %v439
          %v464 = vunpack.c.l.b16 %v440
          %v465 = vpack.c.b16 %v462, %v461
          %v466 = vpack.c.b16 %v464, %v463
          %v483 = vunpack.c.l.b16 %v441
          %v484 = vunpack.c.h.b16 %v441
          %v485 = vunpack.c.l.b16 %v442
          %v486 = vunpack.c.h.b16 %v442
          %v487 = vunpack.c.l.b16 %v443
          %v488 = vunpack.c.h.b16 %v443
          %v489 = vunpack.c.l.b16 %v444
          %v490 = vunpack.c.h.b16 %v444
          %v491 = vunpack.c.l.b16 %v445
          %v492 = vunpack.c.h.b16 %v445
          %v493 = vunpack.c.l.b16 %v446
          %v494 = vunpack.c.h.b16 %v446
          %v495 = vunpack.c.l.b16 %v447
          %v496 = vunpack.c.h.b16 %v447
          %v497 = vunpack.c.l.b16 %v448
          %v498 = vunpack.c.h.b16 %v448
          %v499 = vunpack.c.l.b16 %v449
          %v500 = vunpack.c.h.b16 %v449
          %v501 = vunpack.c.l.b16 %v450
          %v502 = vunpack.c.h.b16 %v450
          %v503 = vunpack.c.l.b16 %v451
          %v504 = vunpack.c.h.b16 %v451
          %v505 = vunpack.c.l.b16 %v452
          %v506 = vunpack.c.h.b16 %v452
          %v507 = vunpack.c.l.b16 %v453
          %v508 = vunpack.c.h.b16 %v453
          %v509 = vunpack.c.l.b16 %v454
          %v510 = vunpack.c.h.b16 %v454
          %v511 = vunpack.c.l.b16 %v455
          %v512 = vunpack.c.h.b16 %v455
          %v513 = vunpack.c.l.b16 %v456
          %v514 = vunpack.c.h.b16 %v456
          %v515 = vpack.c.b16 %v487, %v483
          %v516 = vpack.c.b16 %v488, %v484
          %v517 = vpack.c.b16 %v489, %v485
          %v518 = vpack.c.b16 %v490, %v486
          %v519 = vpack.c.b16 %v495, %v491
          %v520 = vpack.c.b16 %v496, %v492
          %v521 = vpack.c.b16 %v497, %v493
          %v522 = vpack.c.b16 %v498, %v494
          %v523 = vpack.c.b16 %v503, %v499
          %v524 = vpack.c.b16 %v504, %v500
          %v525 = vpack.c.b16 %v505, %v501
          %v526 = vpack.c.b16 %v506, %v502
          %v527 = vpack.c.b16 %v511, %v507
          %v528 = vpack.c.b16 %v512, %v508
          %v529 = vpack.c.b16 %v513, %v509
          %v530 = vpack.c.b16 %v514, %v510
          %vm547 = vcmask 523264
          %v549 = vsel %vm547, %v465, 0
          %v552 = vsel %vm547, %v466, 0
          %554 = vmatprep.subr.bf16.mxu0 0
          %555 = vmatpush1.bf16.msra.mxu0 0
          %556 = vmatprep.subr.bf16.mxu0 0
          %557 = vmatpush1.bf16.msra.mxu0 0
          %558 = vmatprep.subr.bf16.mxu0 0
          %559 = vmatpush1.bf16.msra.mxu0 0
          %560 = vmatprep.subr.bf16.mxu0 0
          %561 = vmatpush1.bf16.msra.mxu0 0
          %562 = vmatprep.subr.bf16.mxu0 %v528
          %563 = vmatpush1.bf16.msra.mxu0 %v527
          %564 = vmatprep.subr.bf16.mxu0 %v524
          %565 = vmatpush1.bf16.msra.mxu0 %v523
          %566 = vmatprep.subr.bf16.mxu0 %v520
          %567 = vmatpush1.bf16.msra.mxu0 %v519
          %568 = vmatprep.subr.bf16.mxu0 %v516
          %569 = vmatpush1.bf16.msra.mxu0 %v515
          %570 = vmatprep.subr.bf16.mxu0 0
          %571 = vmatpush2.bf16.msra.mxu0 0
          %572 = vmatprep.subr.bf16.mxu0 0
          %573 = vmatpush2.bf16.msra.mxu0 0
          %574 = vmatprep.subr.bf16.mxu0 0
          %575 = vmatpush2.bf16.msra.mxu0 0
          %576 = vmatprep.subr.bf16.mxu0 0
          %577 = vmatpush2.bf16.msra.mxu0 0
          %578 = vmatprep.subr.bf16.mxu0 0
          %579 = vmatpush2.bf16.msra.mxu0 0
          %580 = vmatprep.subr.bf16.mxu0 0
          %581 = vmatpush2.bf16.msra.mxu0 0
          %582 = vmatprep.subr.bf16.mxu0 0
          %583 = vmatpush2.bf16.msra.mxu0 0
          %584 = vmatprep.subr.bf16.mxu0 0
          %585 = vmatpush2.bf16.msra.mxu0 0
          %586 = vmatprep.mubr.bf16.mxu0 0
          %587 = vmatmul.mubr.bf16.gmra.mxu0 %v549
          %v588 = vpop.f32.mrf.mxu0
          %v589 = vadd.f32 0.0, %v588
          %v590 = vpop.f32.mrf.mxu0
          %v591 = vadd.f32 0.0, %v590
          %v592 = vpop.f32.mrf.mxu0
          %v593 = vadd.f32 0.0, %v592
          %v594 = vpop.f32.mrf.mxu0
          %v595 = vadd.f32 0.0, %v594
          %596 = vmatprep.mubr.bf16.mxu0 0
          %597 = vmatmul.mubr.bf16.gmra.mxu0 %v552
          %v598 = vpop.f32.mrf.mxu0
          %v599 = vadd.f32 0.0, %v598
          %v600 = vpop.f32.mrf.mxu0
          %v601 = vadd.f32 0.0, %v600
          %v602 = vpop.f32.mrf.mxu0
          %v603 = vadd.f32 0.0, %v602
          %v604 = vpop.f32.mrf.mxu0
          %v605 = vadd.f32 0.0, %v604
          %606 = vdwg.mxu0
          %607 = vmatprep.subr.bf16.mxu0 0
          %608 = vmatpush1.bf16.msra.mxu0 0
          %609 = vmatprep.subr.bf16.mxu0 0
          %610 = vmatpush1.bf16.msra.mxu0 0
          %611 = vmatprep.subr.bf16.mxu0 0
          %612 = vmatpush1.bf16.msra.mxu0 0
          %613 = vmatprep.subr.bf16.mxu0 0
          %614 = vmatpush1.bf16.msra.mxu0 0
          %615 = vmatprep.subr.bf16.mxu0 %v530
          %616 = vmatpush1.bf16.msra.mxu0 %v529
          %617 = vmatprep.subr.bf16.mxu0 %v526
          %618 = vmatpush1.bf16.msra.mxu0 %v525
          %619 = vmatprep.subr.bf16.mxu0 %v522
          %620 = vmatpush1.bf16.msra.mxu0 %v521
          %621 = vmatprep.subr.bf16.mxu0 %v518
          %622 = vmatpush1.bf16.msra.mxu0 %v517
          %623 = vmatprep.subr.bf16.mxu0 0
          %624 = vmatpush2.bf16.msra.mxu0 0
          %625 = vmatprep.subr.bf16.mxu0 0
          %626 = vmatpush2.bf16.msra.mxu0 0
          %627 = vmatprep.subr.bf16.mxu0 0
          %628 = vmatpush2.bf16.msra.mxu0 0
          %629 = vmatprep.subr.bf16.mxu0 0
          %630 = vmatpush2.bf16.msra.mxu0 0
          %631 = vmatprep.subr.bf16.mxu0 0
          %632 = vmatpush2.bf16.msra.mxu0 0
          %633 = vmatprep.subr.bf16.mxu0 0
          %634 = vmatpush2.bf16.msra.mxu0 0
          %635 = vmatprep.subr.bf16.mxu0 0
          %636 = vmatpush2.bf16.msra.mxu0 0
          %637 = vmatprep.subr.bf16.mxu0 0
          %638 = vmatpush2.bf16.msra.mxu0 0
          %639 = vmatprep.mubr.bf16.mxu0 0
          %640 = vmatmul.mubr.bf16.gmra.mxu0 %v549
          %v641 = vpop.f32.mrf.mxu0
          %v642 = vadd.f32 0.0, %v641
          %v643 = vpop.f32.mrf.mxu0
          %v644 = vadd.f32 0.0, %v643
          %v645 = vpop.f32.mrf.mxu0
          %v646 = vadd.f32 0.0, %v645
          %v647 = vpop.f32.mrf.mxu0
          %v648 = vadd.f32 0.0, %v647
          %649 = vmatprep.mubr.bf16.mxu0 0
          %650 = vmatmul.mubr.bf16.gmra.mxu0 %v552
          %v651 = vpop.f32.mrf.mxu0
          %v652 = vadd.f32 0.0, %v651
          %v653 = vpop.f32.mrf.mxu0
          %v654 = vadd.f32 0.0, %v653
          %v655 = vpop.f32.mrf.mxu0
          %v656 = vadd.f32 0.0, %v655
          %v657 = vpop.f32.mrf.mxu0
          %v658 = vadd.f32 0.0, %v657
          %659 = vdwg.mxu0
          %v660 = vld [vmem:[%s367] sm:$0xf]
          %v662 = vlaneseq
          %v663 = vshrl.u32 %v662, 7
          %v664 = vsub.s32 0, %v663
          %v665 = vrot.slane %v660, %v664
          %v666 = vlaneseq
          %v667 = vshrl.u32 %v666, 7
          %v668 = vsub.s32 1, %v667
          %v669 = vrot.slane %v660, %v668
          %v670 = vlaneseq
          %v671 = vshrl.u32 %v670, 7
          %v672 = vsub.s32 2, %v671
          %v673 = vrot.slane %v660, %v672
          %v674 = vlaneseq
          %v675 = vshrl.u32 %v674, 7
          %v676 = vsub.s32 3, %v675
          %v677 = vrot.slane %v660, %v676
          %v682 = vadd.f32 %v589, %v665
          %v683 = vadd.f32 %v591, %v669
          %v684 = vadd.f32 %v642, %v673
          %v685 = vadd.f32 %v644, %v677
          %v686 = vadd.f32 %v593, %v665
          %v687 = vadd.f32 %v595, %v669
          %v688 = vadd.f32 %v646, %v673
          %v689 = vadd.f32 %v648, %v677
          %v690 = vadd.f32 %v599, %v665
          %v691 = vadd.f32 %v601, %v669
          %v692 = vadd.f32 %v652, %v673
          %v693 = vadd.f32 %v654, %v677
          %v694 = vadd.f32 %v603, %v665
          %v695 = vadd.f32 %v605, %v669
          %v696 = vadd.f32 %v656, %v673
          %v697 = vadd.f32 %v658, %v677
          %698 = vst [vmem:[#allocation4] sm:$0xff] %v682
          %699 = vst [vmem:[#allocation4 + $0x8] sm:$0xff] %v683
          %700 = vst [vmem:[#allocation4 + $0x10] sm:$0xff] %v684
          %701 = vst [vmem:[#allocation4 + $0x18] sm:$0xff] %v685
          %702 = vst [vmem:[#allocation4 + $0x20] sm:$0xff] %v686
          %703 = vst [vmem:[#allocation4 + $0x28] sm:$0xff] %v687
          %704 = vst [vmem:[#allocation4 + $0x30] sm:$0xff] %v688
          %705 = vst [vmem:[#allocation4 + $0x38] sm:$0xff] %v689
          %706 = vst [vmem:[#allocation4 + $0x40] sm:$0xff] %v690
          %707 = vst [vmem:[#allocation4 + $0x48] sm:$0xff] %v691
          %708 = vst [vmem:[#allocation4 + $0x50] sm:$0xff] %v692
          %709 = vst [vmem:[#allocation4 + $0x58] sm:$0xff] %v693
          %710 = vst [vmem:[#allocation4 + $0x60] sm:$0xff] %v694
          %711 = vst [vmem:[#allocation4 + $0x68] sm:$0xff] %v695
          %712 = vst [vmem:[#allocation4 + $0x70] sm:$0xff] %v696
          %713 = vst [vmem:[#allocation4 + $0x78] sm:$0xff] %v697
          %v714 = vld [vmem:[%s358] sm:$0xff]
          %v715 = vld [vmem:[%s358 + $0x8] sm:$0xff]
          %v716 = vld [vmem:[%s358 + $0x10] sm:$0xff]
          %v717 = vld [vmem:[%s358 + $0x18] sm:$0xff]
          %v718 = vld [vmem:[%s358 + $0x20] sm:$0xff]
          %v719 = vld [vmem:[%s358 + $0x28] sm:$0xff]
          %v720 = vld [vmem:[%s358 + $0x30] sm:$0xff]
          %v721 = vld [vmem:[%s358 + $0x38] sm:$0xff]
          %v722 = vld [vmem:[%s358 + $0x40] sm:$0xff]
          %v723 = vld [vmem:[%s358 + $0x48] sm:$0xff]
          %v724 = vld [vmem:[%s358 + $0x50] sm:$0xff]
          %v725 = vld [vmem:[%s358 + $0x58] sm:$0xff]
          %v726 = vld [vmem:[%s358 + $0x60] sm:$0xff]
          %v727 = vld [vmem:[%s358 + $0x68] sm:$0xff]
          %v728 = vld [vmem:[%s358 + $0x70] sm:$0xff]
          %v729 = vld [vmem:[%s358 + $0x78] sm:$0xff]
          %v730 = vld [vmem:[%s358 + $0x80] sm:$0xff]
          %v731 = vld [vmem:[%s358 + $0x88] sm:$0xff]
          %v732 = vld [vmem:[%s358 + $0x90] sm:$0xff]
          %v733 = vld [vmem:[%s358 + $0x98] sm:$0xff]
          %v734 = vld [vmem:[%s358 + $0xa0] sm:$0xff]
          %v735 = vld [vmem:[%s358 + $0xa8] sm:$0xff]
          %v736 = vld [vmem:[%s358 + $0xb0] sm:$0xff]
          %v737 = vld [vmem:[%s358 + $0xb8] sm:$0xff]
          %v738 = vld [vmem:[%s358 + $0xc0] sm:$0xff]
          %v739 = vld [vmem:[%s358 + $0xc8] sm:$0xff]
          %v740 = vld [vmem:[%s358 + $0xd0] sm:$0xff]
          %v741 = vld [vmem:[%s358 + $0xd8] sm:$0xff]
          %v742 = vld [vmem:[%s358 + $0xe0] sm:$0xff]
          %v743 = vld [vmem:[%s358 + $0xe8] sm:$0xff]
          %v744 = vld [vmem:[%s358 + $0xf0] sm:$0xff]
          %v745 = vld [vmem:[%s358 + $0xf8] sm:$0xff]
          %v746 = vld [vmem:[#allocation2] sm:$0xff]
          %v747 = vld [vmem:[#allocation3] sm:$0xff]
          %v748 = vpack.c.bf16 %v746, %v746
          %v749 = vld [vmem:[#allocation4] sm:$0xff]
          %v750 = vld [vmem:[#allocation4 + $0x8] sm:$0xff]
          %v751 = vld [vmem:[#allocation4 + $0x10] sm:$0xff]
          %v752 = vld [vmem:[#allocation4 + $0x18] sm:$0xff]
          %v785 = vunpack.c.l.b16 %v714
          %v786 = vunpack.c.h.b16 %v714
          %v787 = vunpack.c.l.b16 %v715
          %v788 = vunpack.c.h.b16 %v715
          %v789 = vunpack.c.l.b16 %v716
          %v790 = vunpack.c.h.b16 %v716
          %v791 = vunpack.c.l.b16 %v717
          %v792 = vunpack.c.h.b16 %v717
          %v793 = vunpack.c.l.b16 %v718
          %v794 = vunpack.c.h.b16 %v718
          %v795 = vunpack.c.l.b16 %v719
          %v796 = vunpack.c.h.b16 %v719
          %v797 = vunpack.c.l.b16 %v720
          %v798 = vunpack.c.h.b16 %v720
          %v799 = vunpack.c.l.b16 %v721
          %v800 = vunpack.c.h.b16 %v721
          %v801 = vunpack.c.l.b16 %v722
          %v802 = vunpack.c.h.b16 %v722
          %v803 = vunpack.c.l.b16 %v723
          %v804 = vunpack.c.h.b16 %v723
          %v805 = vunpack.c.l.b16 %v724
          %v806 = vunpack.c.h.b16 %v724
          %v807 = vunpack.c.l.b16 %v725
          %v808 = vunpack.c.h.b16 %v725
          %v809 = vunpack.c.l.b16 %v726
          %v810 = vunpack.c.h.b16 %v726
          %v811 = vunpack.c.l.b16 %v727
          %v812 = vunpack.c.h.b16 %v727
          %v813 = vunpack.c.l.b16 %v728
          %v814 = vunpack.c.h.b16 %v728
          %v815 = vunpack.c.l.b16 %v729
          %v816 = vunpack.c.h.b16 %v729
          %v817 = vunpack.c.l.b16 %v730
          %v818 = vunpack.c.h.b16 %v730
          %v819 = vunpack.c.l.b16 %v731
          %v820 = vunpack.c.h.b16 %v731
          %v821 = vunpack.c.l.b16 %v732
          %v822 = vunpack.c.h.b16 %v732
          %v823 = vunpack.c.l.b16 %v733
          %v824 = vunpack.c.h.b16 %v733
          %v825 = vunpack.c.l.b16 %v734
          %v826 = vunpack.c.h.b16 %v734
          %v827 = vunpack.c.l.b16 %v735
          %v828 = vunpack.c.h.b16 %v735
          %v829 = vunpack.c.l.b16 %v736
          %v830 = vunpack.c.h.b16 %v736
          %v831 = vunpack.c.l.b16 %v737
          %v832 = vunpack.c.h.b16 %v737
          %v833 = vunpack.c.l.b16 %v738
          %v834 = vunpack.c.h.b16 %v738
          %v835 = vunpack.c.l.b16 %v739
          %v836 = vunpack.c.h.b16 %v739
          %v837 = vunpack.c.l.b16 %v740
          %v838 = vunpack.c.h.b16 %v740
          %v839 = vunpack.c.l.b16 %v741
          %v840 = vunpack.c.h.b16 %v741
          %v841 = vunpack.c.l.b16 %v742
          %v842 = vunpack.c.h.b16 %v742
          %v843 = vunpack.c.l.b16 %v743
          %v844 = vunpack.c.h.b16 %v743
          %v845 = vunpack.c.l.b16 %v744
          %v846 = vunpack.c.h.b16 %v744
          %v847 = vunpack.c.l.b16 %v745
          %v848 = vunpack.c.h.b16 %v745
          %v849 = vpack.c.b16 %v789, %v785
          %v850 = vpack.c.b16 %v790, %v786
          %v851 = vpack.c.b16 %v791, %v787
          %v852 = vpack.c.b16 %v792, %v788
          %v853 = vpack.c.b16 %v797, %v793
          %v854 = vpack.c.b16 %v798, %v794
          %v855 = vpack.c.b16 %v799, %v795
          %v856 = vpack.c.b16 %v800, %v796
          %v857 = vpack.c.b16 %v805, %v801
          %v858 = vpack.c.b16 %v806, %v802
          %v859 = vpack.c.b16 %v807, %v803
          %v860 = vpack.c.b16 %v808, %v804
          %v861 = vpack.c.b16 %v813, %v809
          %v862 = vpack.c.b16 %v814, %v810
          %v863 = vpack.c.b16 %v815, %v811
          %v864 = vpack.c.b16 %v816, %v812
          %v865 = vpack.c.b16 %v821, %v817
          %v866 = vpack.c.b16 %v822, %v818
          %v867 = vpack.c.b16 %v823, %v819
          %v868 = vpack.c.b16 %v824, %v820
          %v869 = vpack.c.b16 %v829, %v825
          %v870 = vpack.c.b16 %v830, %v826
          %v871 = vpack.c.b16 %v831, %v827
          %v872 = vpack.c.b16 %v832, %v828
          %v873 = vpack.c.b16 %v837, %v833
          %v874 = vpack.c.b16 %v838, %v834
          %v875 = vpack.c.b16 %v839, %v835
          %v876 = vpack.c.b16 %v840, %v836
          %v877 = vpack.c.b16 %v845, %v841
          %v878 = vpack.c.b16 %v846, %v842
          %v879 = vpack.c.b16 %v847, %v843
          %v880 = vpack.c.b16 %v848, %v844
          %913 = vmatprep.subr.bf16.mxu0 %v878
          %914 = vmatpush1.bf16.msra.mxu0 %v877
          %915 = vmatprep.subr.bf16.mxu0 %v874
          %916 = vmatpush1.bf16.msra.mxu0 %v873
          %917 = vmatprep.subr.bf16.mxu0 %v870
          %918 = vmatpush1.bf16.msra.mxu0 %v869
          %919 = vmatprep.subr.bf16.mxu0 %v866
          %920 = vmatpush1.bf16.msra.mxu0 %v865
          %921 = vmatprep.subr.bf16.mxu0 %v862
          %922 = vmatpush1.bf16.msra.mxu0 %v861
          %923 = vmatprep.subr.bf16.mxu0 %v858
          %924 = vmatpush1.bf16.msra.mxu0 %v857
          %925 = vmatprep.subr.bf16.mxu0 %v854
          %926 = vmatpush1.bf16.msra.mxu0 %v853
          %927 = vmatprep.subr.bf16.mxu0 %v850
          %928 = vmatpush1.bf16.msra.mxu0 %v849
          %929 = vmatprep.subr.bf16.mxu0 0
          %930 = vmatpush2.bf16.msra.mxu0 0
          %931 = vmatprep.subr.bf16.mxu0 0
          %932 = vmatpush2.bf16.msra.mxu0 0
          %933 = vmatprep.subr.bf16.mxu0 0
          %934 = vmatpush2.bf16.msra.mxu0 0
          %935 = vmatprep.subr.bf16.mxu0 0
          %936 = vmatpush2.bf16.msra.mxu0 0
          %937 = vmatprep.subr.bf16.mxu0 0
          %938 = vmatpush2.bf16.msra.mxu0 0
          %939 = vmatprep.subr.bf16.mxu0 0
          %940 = vmatpush2.bf16.msra.mxu0 0
          %941 = vmatprep.subr.bf16.mxu0 0
          %942 = vmatpush2.bf16.msra.mxu0 0
          %943 = vmatprep.subr.bf16.mxu0 0
          %944 = vmatpush2.bf16.msra.mxu0 0
          %945 = vmatprep.mubr.bf16.mxu0 0
          %946 = vmatmul.mubr.bf16.gmra.mxu0 %v748
          %v947 = vpop.f32.mrf.mxu0
          %v948 = vadd.f32 %v749, %v947
          %v949 = vpop.f32.mrf.mxu0
          %v950 = vadd.f32 %v750, %v949
          %v951 = vpop.f32.mrf.mxu0
          %v952 = vpop.f32.mrf.mxu0
          %953 = vdwg.mxu0
          %954 = vmatprep.subr.bf16.mxu0 %v880
          %955 = vmatpush1.bf16.msra.mxu0 %v879
          %956 = vmatprep.subr.bf16.mxu0 %v876
          %957 = vmatpush1.bf16.msra.mxu0 %v875
          %958 = vmatprep.subr.bf16.mxu0 %v872
          %959 = vmatpush1.bf16.msra.mxu0 %v871
          %960 = vmatprep.subr.bf16.mxu0 %v868
          %961 = vmatpush1.bf16.msra.mxu0 %v867
          %962 = vmatprep.subr.bf16.mxu0 %v864
          %963 = vmatpush1.bf16.msra.mxu0 %v863
          %964 = vmatprep.subr.bf16.mxu0 %v860
          %965 = vmatpush1.bf16.msra.mxu0 %v859
          %966 = vmatprep.subr.bf16.mxu0 %v856
          %967 = vmatpush1.bf16.msra.mxu0 %v855
          %968 = vmatprep.subr.bf16.mxu0 %v852
          %969 = vmatpush1.bf16.msra.mxu0 %v851
          %970 = vmatprep.subr.bf16.mxu0 0
          %971 = vmatpush2.bf16.msra.mxu0 0
          %972 = vmatprep.subr.bf16.mxu0 0
          %973 = vmatpush2.bf16.msra.mxu0 0
          %974 = vmatprep.subr.bf16.mxu0 0
          %975 = vmatpush2.bf16.msra.mxu0 0
          %976 = vmatprep.subr.bf16.mxu0 0
          %977 = vmatpush2.bf16.msra.mxu0 0
          %978 = vmatprep.subr.bf16.mxu0 0
          %979 = vmatpush2.bf16.msra.mxu0 0
          %980 = vmatprep.subr.bf16.mxu0 0
          %981 = vmatpush2.bf16.msra.mxu0 0
          %982 = vmatprep.subr.bf16.mxu0 0
          %983 = vmatpush2.bf16.msra.mxu0 0
          %984 = vmatprep.subr.bf16.mxu0 0
          %985 = vmatpush2.bf16.msra.mxu0 0
          %986 = vmatprep.mubr.bf16.mxu0 0
          %987 = vmatmul.mubr.bf16.gmra.mxu0 %v748
          %v988 = vpop.f32.mrf.mxu0
          %v989 = vadd.f32 %v751, %v988
          %v990 = vpop.f32.mrf.mxu0
          %v991 = vadd.f32 %v752, %v990
          %v992 = vpop.f32.mrf.mxu0
          %v993 = vpop.f32.mrf.mxu0
          %994 = vdwg.mxu0
          %v995 = vxor.u32 %v948, 2147483648
          %v996 = vmul.f32 %v995, 1.442695
          %v997 = vpow.pop %v996
          %v998 = vadd.f32 %v997, 1.0
          %v999 = vrcp.pop %v998
          %v1000 = vmul.f32 1.0, %v999
          %v1001 = vxor.u32 %v950, 2147483648
          %v1002 = vmul.f32 %v1001, 1.442695
          %v1003 = vpow.pop %v1002
          %v1004 = vadd.f32 %v1003, 1.0
          %v1005 = vrcp.pop %v1004
          %v1006 = vmul.f32 1.0, %v1005
          %v1007 = vtanh.pop %v989
          %v1008 = vxor.u32 %v991, 2147483648
          %v1009 = vmul.f32 %v1008, 1.442695
          %v1010 = vpow.pop %v1009
          %v1011 = vadd.f32 %v1010, 1.0
          %v1012 = vrcp.pop %v1011
          %v1013 = vmul.f32 1.0, %v1012
          %v1014 = vmul.f32 %v1006, %v747
          %v1015 = vmul.f32 %v1000, %v1007
          %v1016 = vadd.f32 %v1014, %v1015
          %v1017 = vtanh.pop %v1016
          %v1018 = vmul.f32 %v1013, %v1017
          %1019 = vst [vmem:[%s406] sm:$0xff] %v1018
          %v1020 = vpack.c.bf16 %v1018, %v1018
          %s1021 = scalar_lea.vmem [#allocation4], 32
          %v1022 = vld [vmem:[%s1021] sm:$0xff]
          %v1023 = vld [vmem:[%s1021 + $0x8] sm:$0xff]
          %v1024 = vld [vmem:[%s1021 + $0x10] sm:$0xff]
          %v1025 = vld [vmem:[%s1021 + $0x18] sm:$0xff]
          %1026 = vmatprep.subr.bf16.mxu0 %v878
          %1027 = vmatpush1.bf16.msra.mxu0 %v877
          %1028 = vmatprep.subr.bf16.mxu0 %v874
          %1029 = vmatpush1.bf16.msra.mxu0 %v873
          %1030 = vmatprep.subr.bf16.mxu0 %v870
          %1031 = vmatpush1.bf16.msra.mxu0 %v869
          %1032 = vmatprep.subr.bf16.mxu0 %v866
          %1033 = vmatpush1.bf16.msra.mxu0 %v865
          %1034 = vmatprep.subr.bf16.mxu0 %v862
          %1035 = vmatpush1.bf16.msra.mxu0 %v861
          %1036 = vmatprep.subr.bf16.mxu0 %v858
          %1037 = vmatpush1.bf16.msra.mxu0 %v857
          %1038 = vmatprep.subr.bf16.mxu0 %v854
          %1039 = vmatpush1.bf16.msra.mxu0 %v853
          %1040 = vmatprep.subr.bf16.mxu0 %v850
          %1041 = vmatpush1.bf16.msra.mxu0 %v849
          %1042 = vmatprep.subr.bf16.mxu0 0
          %1043 = vmatpush2.bf16.msra.mxu0 0
          %1044 = vmatprep.subr.bf16.mxu0 0
          %1045 = vmatpush2.bf16.msra.mxu0 0
          %1046 = vmatprep.subr.bf16.mxu0 0
          %1047 = vmatpush2.bf16.msra.mxu0 0
          %1048 = vmatprep.subr.bf16.mxu0 0
          %1049 = vmatpush2.bf16.msra.mxu0 0
          %1050 = vmatprep.subr.bf16.mxu0 0
          %1051 = vmatpush2.bf16.msra.mxu0 0
          %1052 = vmatprep.subr.bf16.mxu0 0
          %1053 = vmatpush2.bf16.msra.mxu0 0
          %1054 = vmatprep.subr.bf16.mxu0 0
          %1055 = vmatpush2.bf16.msra.mxu0 0
          %1056 = vmatprep.subr.bf16.mxu0 0
          %1057 = vmatpush2.bf16.msra.mxu0 0
          %1058 = vmatprep.mubr.bf16.mxu0 0
          %1059 = vmatmul.mubr.bf16.gmra.mxu0 %v1020
          %v1060 = vpop.f32.mrf.mxu0
          %v1061 = vadd.f32 %v1022, %v1060
          %v1062 = vpop.f32.mrf.mxu0
          %v1063 = vadd.f32 %v1023, %v1062
          %v1064 = vpop.f32.mrf.mxu0
          %v1065 = vpop.f32.mrf.mxu0
          %1066 = vdwg.mxu0
          %1067 = vmatprep.subr.bf16.mxu0 %v880
          %1068 = vmatpush1.bf16.msra.mxu0 %v879
          %1069 = vmatprep.subr.bf16.mxu0 %v876
          %1070 = vmatpush1.bf16.msra.mxu0 %v875
          %1071 = vmatprep.subr.bf16.mxu0 %v872
          %1072 = vmatpush1.bf16.msra.mxu0 %v871
          %1073 = vmatprep.subr.bf16.mxu0 %v868
          %1074 = vmatpush1.bf16.msra.mxu0 %v867
          %1075 = vmatprep.subr.bf16.mxu0 %v864
          %1076 = vmatpush1.bf16.msra.mxu0 %v863
          %1077 = vmatprep.subr.bf16.mxu0 %v860
          %1078 = vmatpush1.bf16.msra.mxu0 %v859
          %1079 = vmatprep.subr.bf16.mxu0 %v856
          %1080 = vmatpush1.bf16.msra.mxu0 %v855
          %1081 = vmatprep.subr.bf16.mxu0 %v852
          %1082 = vmatpush1.bf16.msra.mxu0 %v851
          %1083 = vmatprep.subr.bf16.mxu0 0
          %1084 = vmatpush2.bf16.msra.mxu0 0
          %1085 = vmatprep.subr.bf16.mxu0 0
          %1086 = vmatpush2.bf16.msra.mxu0 0
          %1087 = vmatprep.subr.bf16.mxu0 0
          %1088 = vmatpush2.bf16.msra.mxu0 0
          %1089 = vmatprep.subr.bf16.mxu0 0
          %1090 = vmatpush2.bf16.msra.mxu0 0
          %1091 = vmatprep.subr.bf16.mxu0 0
          %1092 = vmatpush2.bf16.msra.mxu0 0
          %1093 = vmatprep.subr.bf16.mxu0 0
          %1094 = vmatpush2.bf16.msra.mxu0 0
          %1095 = vmatprep.subr.bf16.mxu0 0
          %1096 = vmatpush2.bf16.msra.mxu0 0
          %1097 = vmatprep.subr.bf16.mxu0 0
          %1098 = vmatpush2.bf16.msra.mxu0 0
          %1099 = vmatprep.mubr.bf16.mxu0 0
          %1100 = vmatmul.mubr.bf16.gmra.mxu0 %v1020
          %v1101 = vpop.f32.mrf.mxu0
          %v1102 = vadd.f32 %v1024, %v1101
          %v1103 = vpop.f32.mrf.mxu0
          %v1104 = vadd.f32 %v1025, %v1103
          %v1105 = vpop.f32.mrf.mxu0
          %v1106 = vpop.f32.mrf.mxu0
          %1107 = vdwg.mxu0
          %v1108 = vxor.u32 %v1061, 2147483648
          %v1109 = vmul.f32 %v1108, 1.442695
          %v1110 = vpow.pop %v1109
          %v1111 = vadd.f32 %v1110, 1.0
          %v1112 = vrcp.pop %v1111
          %v1113 = vmul.f32 1.0, %v1112
          %v1114 = vxor.u32 %v1063, 2147483648
          %v1115 = vmul.f32 %v1114, 1.442695
          %v1116 = vpow.pop %v1115
          %v1117 = vadd.f32 %v1116, 1.0
          %v1118 = vrcp.pop %v1117
          %v1119 = vmul.f32 1.0, %v1118
          %v1120 = vtanh.pop %v1102
          %v1121 = vxor.u32 %v1104, 2147483648
          %v1122 = vmul.f32 %v1121, 1.442695
          %v1123 = vpow.pop %v1122
          %v1124 = vadd.f32 %v1123, 1.0
          %v1125 = vrcp.pop %v1124
          %v1126 = vmul.f32 1.0, %v1125
          %v1127 = vmul.f32 %v1119, %v1016
          %v1128 = vmul.f32 %v1113, %v1120
          %v1129 = vadd.f32 %v1127, %v1128
          %v1130 = vtanh.pop %v1129
          %v1131 = vmul.f32 %v1126, %v1130
          %s1132 = sadd.s32 %s426, 1
          %p1133 = scmp.lt.s32.totalorder %s1132, %s425
          %s1134 = scalar_select %p1133, 1, 0
          %v1135 = vstv %s1134
          %vm1136 = vcmp.eq.s32.totalorder %v1135, 1
          %v1137 = vsel %vm1136, %v1131, 0.0
          %s1138 = scalar_lea.vmem %s406, 8 [#allocation13]
          %1139 = vst [vmem:[%s1138] sm:$0xff] %v1137
          %v1140 = vsel %vm1136, %v1131, %v1018
          %v1141 = vsel %vm1136, %v1129, %v1016
          %v1142 = vpack.c.bf16 %v1140, %v1140
          %s1143 = scalar_lea.vmem [#allocation4], 64
          %v1144 = vld [vmem:[%s1143] sm:$0xff]
          %v1145 = vld [vmem:[%s1143 + $0x8] sm:$0xff]
          %v1146 = vld [vmem:[%s1143 + $0x10] sm:$0xff]
          %v1147 = vld [vmem:[%s1143 + $0x18] sm:$0xff]
          %1148 = vmatprep.subr.bf16.mxu0 %v878
          %1149 = vmatpush1.bf16.msra.mxu0 %v877
          %1150 = vmatprep.subr.bf16.mxu0 %v874
          %1151 = vmatpush1.bf16.msra.mxu0 %v873
          %1152 = vmatprep.subr.bf16.mxu0 %v870
          %1153 = vmatpush1.bf16.msra.mxu0 %v869
          %1154 = vmatprep.subr.bf16.mxu0 %v866
          %1155 = vmatpush1.bf16.msra.mxu0 %v865
          %1156 = vmatprep.subr.bf16.mxu0 %v862
          %1157 = vmatpush1.bf16.msra.mxu0 %v861
          %1158 = vmatprep.subr.bf16.mxu0 %v858
          %1159 = vmatpush1.bf16.msra.mxu0 %v857
          %1160 = vmatprep.subr.bf16.mxu0 %v854
          %1161 = vmatpush1.bf16.msra.mxu0 %v853
          %1162 = vmatprep.subr.bf16.mxu0 %v850
          %1163 = vmatpush1.bf16.msra.mxu0 %v849
          %1164 = vmatprep.subr.bf16.mxu0 0
          %1165 = vmatpush2.bf16.msra.mxu0 0
          %1166 = vmatprep.subr.bf16.mxu0 0
          %1167 = vmatpush2.bf16.msra.mxu0 0
          %1168 = vmatprep.subr.bf16.mxu0 0
          %1169 = vmatpush2.bf16.msra.mxu0 0
          %1170 = vmatprep.subr.bf16.mxu0 0
          %1171 = vmatpush2.bf16.msra.mxu0 0
          %1172 = vmatprep.subr.bf16.mxu0 0
          %1173 = vmatpush2.bf16.msra.mxu0 0
          %1174 = vmatprep.subr.bf16.mxu0 0
          %1175 = vmatpush2.bf16.msra.mxu0 0
          %1176 = vmatprep.subr.bf16.mxu0 0
          %1177 = vmatpush2.bf16.msra.mxu0 0
          %1178 = vmatprep.subr.bf16.mxu0 0
          %1179 = vmatpush2.bf16.msra.mxu0 0
          %1180 = vmatprep.mubr.bf16.mxu0 0
          %1181 = vmatmul.mubr.bf16.gmra.mxu0 %v1142
          %v1182 = vpop.f32.mrf.mxu0
          %v1183 = vadd.f32 %v1144, %v1182
          %v1184 = vpop.f32.mrf.mxu0
          %v1185 = vadd.f32 %v1145, %v1184
          %v1186 = vpop.f32.mrf.mxu0
          %v1187 = vpop.f32.mrf.mxu0
          %1188 = vdwg.mxu0
          %1189 = vmatprep.subr.bf16.mxu0 %v880
          %1190 = vmatpush1.bf16.msra.mxu0 %v879
          %1191 = vmatprep.subr.bf16.mxu0 %v876
          %1192 = vmatpush1.bf16.msra.mxu0 %v875
          %1193 = vmatprep.subr.bf16.mxu0 %v872
          %1194 = vmatpush1.bf16.msra.mxu0 %v871
          %1195 = vmatprep.subr.bf16.mxu0 %v868
          %1196 = vmatpush1.bf16.msra.mxu0 %v867
          %1197 = vmatprep.subr.bf16.mxu0 %v864
          %1198 = vmatpush1.bf16.msra.mxu0 %v863
          %1199 = vmatprep.subr.bf16.mxu0 %v860
          %1200 = vmatpush1.bf16.msra.mxu0 %v859
          %1201 = vmatprep.subr.bf16.mxu0 %v856
          %1202 = vmatpush1.bf16.msra.mxu0 %v855
          %1203 = vmatprep.subr.bf16.mxu0 %v852
          %1204 = vmatpush1.bf16.msra.mxu0 %v851
          %1205 = vmatprep.subr.bf16.mxu0 0
          %1206 = vmatpush2.bf16.msra.mxu0 0
          %1207 = vmatprep.subr.bf16.mxu0 0
          %1208 = vmatpush2.bf16.msra.mxu0 0
          %1209 = vmatprep.subr.bf16.mxu0 0
          %1210 = vmatpush2.bf16.msra.mxu0 0
          %1211 = vmatprep.subr.bf16.mxu0 0
          %1212 = vmatpush2.bf16.msra.mxu0 0
          %1213 = vmatprep.subr.bf16.mxu0 0
          %1214 = vmatpush2.bf16.msra.mxu0 0
          %1215 = vmatprep.subr.bf16.mxu0 0
          %1216 = vmatpush2.bf16.msra.mxu0 0
          %1217 = vmatprep.subr.bf16.mxu0 0
          %1218 = vmatpush2.bf16.msra.mxu0 0
          %1219 = vmatprep.subr.bf16.mxu0 0
          %1220 = vmatpush2.bf16.msra.mxu0 0
          %1221 = vmatprep.mubr.bf16.mxu0 0
          %1222 = vmatmul.mubr.bf16.gmra.mxu0 %v1142
          %v1223 = vpop.f32.mrf.mxu0
          %v1224 = vadd.f32 %v1146, %v1223
          %v1225 = vpop.f32.mrf.mxu0
          %v1226 = vadd.f32 %v1147, %v1225
          %v1227 = vpop.f32.mrf.mxu0
          %v1228 = vpop.f32.mrf.mxu0
          %1229 = vdwg.mxu0
          %v1230 = vxor.u32 %v1183, 2147483648
          %v1231 = vmul.f32 %v1230, 1.442695
          %v1232 = vpow.pop %v1231
          %v1233 = vadd.f32 %v1232, 1.0
          %v1234 = vrcp.pop %v1233
          %v1235 = vmul.f32 1.0, %v1234
          %v1236 = vxor.u32 %v1185, 2147483648
          %v1237 = vmul.f32 %v1236, 1.442695
          %v1238 = vpow.pop %v1237
          %v1239 = vadd.f32 %v1238, 1.0
          %v1240 = vrcp.pop %v1239
          %v1241 = vmul.f32 1.0, %v1240
          %v1242 = vtanh.pop %v1224
          %v1243 = vxor.u32 %v1226, 2147483648
          %v1244 = vmul.f32 %v1243, 1.442695
          %v1245 = vpow.pop %v1244
          %v1246 = vadd.f32 %v1245, 1.0
          %v1247 = vrcp.pop %v1246
          %v1248 = vmul.f32 1.0, %v1247
          %v1249 = vmul.f32 %v1241, %v1141
          %v1250 = vmul.f32 %v1235, %v1242
          %v1251 = vadd.f32 %v1249, %v1250
          %v1252 = vtanh.pop %v1251
          %v1253 = vmul.f32 %v1248, %v1252
          %s1254 = sadd.s32 %s426, 2
          %p1255 = scmp.lt.s32.totalorder %s1254, %s425
          %s1256 = scalar_select %p1255, 1, 0
          %v1257 = vstv %s1256
          %vm1258 = vcmp.eq.s32.totalorder %v1257, 1
          %v1259 = vsel %vm1258, %v1253, 0.0
          %s1260 = scalar_lea.vmem %s406, 16 [#allocation13]
          %1261 = vst [vmem:[%s1260] sm:$0xff] %v1259
          %v1262 = vsel %vm1258, %v1253, %v1140
          %v1263 = vsel %vm1258, %v1251, %v1141
          %v1264 = vpack.c.bf16 %v1262, %v1262
          %s1265 = scalar_lea.vmem [#allocation4], 96
          %v1266 = vld [vmem:[%s1265] sm:$0xff]
          %v1267 = vld [vmem:[%s1265 + $0x8] sm:$0xff]
          %v1268 = vld [vmem:[%s1265 + $0x10] sm:$0xff]
          %v1269 = vld [vmem:[%s1265 + $0x18] sm:$0xff]
          %1270 = vmatprep.subr.bf16.mxu0 %v878
          %1271 = vmatpush1.bf16.msra.mxu0 %v877
          %1272 = vmatprep.subr.bf16.mxu0 %v874
          %1273 = vmatpush1.bf16.msra.mxu0 %v873
          %1274 = vmatprep.subr.bf16.mxu0 %v870
          %1275 = vmatpush1.bf16.msra.mxu0 %v869
          %1276 = vmatprep.subr.bf16.mxu0 %v866
          %1277 = vmatpush1.bf16.msra.mxu0 %v865
          %1278 = vmatprep.subr.bf16.mxu0 %v862
          %1279 = vmatpush1.bf16.msra.mxu0 %v861
          %1280 = vmatprep.subr.bf16.mxu0 %v858
          %1281 = vmatpush1.bf16.msra.mxu0 %v857
          %1282 = vmatprep.subr.bf16.mxu0 %v854
          %1283 = vmatpush1.bf16.msra.mxu0 %v853
          %1284 = vmatprep.subr.bf16.mxu0 %v850
          %1285 = vmatpush1.bf16.msra.mxu0 %v849
          %1286 = vmatprep.subr.bf16.mxu0 0
          %1287 = vmatpush2.bf16.msra.mxu0 0
          %1288 = vmatprep.subr.bf16.mxu0 0
          %1289 = vmatpush2.bf16.msra.mxu0 0
          %1290 = vmatprep.subr.bf16.mxu0 0
          %1291 = vmatpush2.bf16.msra.mxu0 0
          %1292 = vmatprep.subr.bf16.mxu0 0
          %1293 = vmatpush2.bf16.msra.mxu0 0
          %1294 = vmatprep.subr.bf16.mxu0 0
          %1295 = vmatpush2.bf16.msra.mxu0 0
          %1296 = vmatprep.subr.bf16.mxu0 0
          %1297 = vmatpush2.bf16.msra.mxu0 0
          %1298 = vmatprep.subr.bf16.mxu0 0
          %1299 = vmatpush2.bf16.msra.mxu0 0
          %1300 = vmatprep.subr.bf16.mxu0 0
          %1301 = vmatpush2.bf16.msra.mxu0 0
          %1302 = vmatprep.mubr.bf16.mxu0 0
          %1303 = vmatmul.mubr.bf16.gmra.mxu0 %v1264
          %v1304 = vpop.f32.mrf.mxu0
          %v1305 = vadd.f32 %v1266, %v1304
          %v1306 = vpop.f32.mrf.mxu0
          %v1307 = vadd.f32 %v1267, %v1306
          %v1308 = vpop.f32.mrf.mxu0
          %v1309 = vpop.f32.mrf.mxu0
          %1310 = vdwg.mxu0
          %1311 = vmatprep.subr.bf16.mxu0 %v880
          %1312 = vmatpush1.bf16.msra.mxu0 %v879
          %1313 = vmatprep.subr.bf16.mxu0 %v876
          %1314 = vmatpush1.bf16.msra.mxu0 %v875
          %1315 = vmatprep.subr.bf16.mxu0 %v872
          %1316 = vmatpush1.bf16.msra.mxu0 %v871
          %1317 = vmatprep.subr.bf16.mxu0 %v868
          %1318 = vmatpush1.bf16.msra.mxu0 %v867
          %1319 = vmatprep.subr.bf16.mxu0 %v864
          %1320 = vmatpush1.bf16.msra.mxu0 %v863
          %1321 = vmatprep.subr.bf16.mxu0 %v860
          %1322 = vmatpush1.bf16.msra.mxu0 %v859
          %1323 = vmatprep.subr.bf16.mxu0 %v856
          %1324 = vmatpush1.bf16.msra.mxu0 %v855
          %1325 = vmatprep.subr.bf16.mxu0 %v852
          %1326 = vmatpush1.bf16.msra.mxu0 %v851
          %1327 = vmatprep.subr.bf16.mxu0 0
          %1328 = vmatpush2.bf16.msra.mxu0 0
          %1329 = vmatprep.subr.bf16.mxu0 0
          %1330 = vmatpush2.bf16.msra.mxu0 0
          %1331 = vmatprep.subr.bf16.mxu0 0
          %1332 = vmatpush2.bf16.msra.mxu0 0
          %1333 = vmatprep.subr.bf16.mxu0 0
          %1334 = vmatpush2.bf16.msra.mxu0 0
          %1335 = vmatprep.subr.bf16.mxu0 0
          %1336 = vmatpush2.bf16.msra.mxu0 0
          %1337 = vmatprep.subr.bf16.mxu0 0
          %1338 = vmatpush2.bf16.msra.mxu0 0
          %1339 = vmatprep.subr.bf16.mxu0 0
          %1340 = vmatpush2.bf16.msra.mxu0 0
          %1341 = vmatprep.subr.bf16.mxu0 0
          %1342 = vmatpush2.bf16.msra.mxu0 0
          %1343 = vmatprep.mubr.bf16.mxu0 0
          %1344 = vmatmul.mubr.bf16.gmra.mxu0 %v1264
          %v1345 = vpop.f32.mrf.mxu0
          %v1346 = vadd.f32 %v1268, %v1345
          %v1347 = vpop.f32.mrf.mxu0
          %v1348 = vadd.f32 %v1269, %v1347
          %v1349 = vpop.f32.mrf.mxu0
          %v1350 = vpop.f32.mrf.mxu0
          %1351 = vdwg.mxu0
          %v1352 = vxor.u32 %v1305, 2147483648
          %v1353 = vmul.f32 %v1352, 1.442695
          %v1354 = vpow.pop %v1353
          %v1355 = vadd.f32 %v1354, 1.0
          %v1356 = vrcp.pop %v1355
          %v1357 = vmul.f32 1.0, %v1356
          %v1358 = vxor.u32 %v1307, 2147483648
          %v1359 = vmul.f32 %v1358, 1.442695
          %v1360 = vpow.pop %v1359
          %v1361 = vadd.f32 %v1360, 1.0
          %v1362 = vrcp.pop %v1361
          %v1363 = vmul.f32 1.0, %v1362
          %v1364 = vtanh.pop %v1346
          %v1365 = vxor.u32 %v1348, 2147483648
          %v1366 = vmul.f32 %v1365, 1.442695
          %v1367 = vpow.pop %v1366
          %v1368 = vadd.f32 %v1367, 1.0
          %v1369 = vrcp.pop %v1368
          %v1370 = vmul.f32 1.0, %v1369
          %v1371 = vmul.f32 %v1363, %v1263
          %v1372 = vmul.f32 %v1357, %v1364
          %v1373 = vadd.f32 %v1371, %v1372
          %v1374 = vtanh.pop %v1373
          %v1375 = vmul.f32 %v1370, %v1374
          %s1376 = sadd.s32 %s426, 3
          %p1377 = scmp.lt.s32.totalorder %s1376, %s425
          %s1378 = scalar_select %p1377, 1, 0
          %v1379 = vstv %s1378
          %vm1380 = vcmp.eq.s32.totalorder %v1379, 1
          %v1381 = vsel %vm1380, %v1375, 0.0
          %s1382 = scalar_lea.vmem %s406, 24 [#allocation13]
          %1383 = vst [vmem:[%s1382] sm:$0xff] %v1381
          %v1384 = vsel %vm1380, %v1375, %v1262
          %v1385 = vsel %vm1380, %v1373, %v1263
          %1386 = vst [vmem:[#allocation2] sm:$0xff] %v1384
          %1387 = vst [vmem:[#allocation3] sm:$0xff] %v1385
        $region60: #{tpu_custom_call.1} parent=35 // pred_fallthru
          _
        %p1388 = scmp.ge.s32.totalorder %s426, %s425
        // Predicated region
        $region61: #{tpu_custom_call.1} parent=35 // pred_check
          %p1389 = pneg %p1388
        $region62: #{tpu_custom_call.1} parent=35 // pred_check_branch
          %1391 = sbr.rel (%p1389) target = $region64
        $region63: #{tpu_custom_call.1} parent=35 // pred_region
          %1392 = vst [vmem:[%s406] sm:$0xff] 0.0
          %1393 = vst [vmem:[%s406 + $0x8] sm:$0xff] 0.0
          %1394 = vst [vmem:[%s406 + $0x10] sm:$0xff] 0.0
          %1395 = vst [vmem:[%s406 + $0x18] sm:$0xff] 0.0
        $region64: #{tpu_custom_call.1} parent=35 // pred_fallthru
          _
        %p1396 = scmp.eq.s32.totalorder %s38, 1
        // Predicated region
        $region65: #{tpu_custom_call.1} parent=35 // pred_check
          %p1397 = pneg %p1396
        $region66: #{tpu_custom_call.1} parent=35 // pred_check_branch
          %1399 = sbr.rel (%p1397) target = $region68
        $region67: #{tpu_custom_call.1} parent=35 // pred_region
          %v1400 = vld [vmem:[#allocation2] sm:$0xff]
          %1401 = vst [vmem:[%s413] sm:$0xff] %v1400
          %v1402 = vld [vmem:[#allocation3] sm:$0xff]
          %1403 = vst [vmem:[%s420] sm:$0xff] %v1402
        $region68: #{tpu_custom_call.1} parent=35 // pred_fallthru
          _
        %s1404 = sand.u32 %s161, 1
        %s1405 = scalar_lea.sflag [#allocation7], %s1404
        %s1406 = sand.u32 %s161, 1
        %s1407 = smul.addr %s1406, 32
        %s1408 = scalar_lea.vmem [#allocation13], %s1407
        %s1409 = sand.u32 %s33, 1
        %s1410 = scalar_lea.sflag [#allocation15], %s1409
        %s1411 = sand.u32 %s187, 1
        %s1412 = smul.addr %s1411, 8
        %s1413 = scalar_lea.vmem [#allocation14], %s1412
        %s1414 = sand.u32 %s33, 1
        %s1415 = scalar_lea.sflag [#allocation15], %s1414
        %s1416 = sand.u32 %s213, 1
        %s1417 = smul.addr %s1416, 8
        %s1418 = scalar_lea.vmem [#allocation16], %s1417
        // Predicated region
        $region69: #{tpu_custom_call.1} parent=35 // pred_check
          %p1419 = pneg %p171
        $region70: #{tpu_custom_call.1} parent=35 // pred_check_branch
          %1421 = sbr.rel (%p1419) target = $region72
        $region71: #{tpu_custom_call.1} parent=35 // pred_region
          %s1422 = smul.u32 4, %s38
          %s1424 = ssub.s32 512, 512
          %1425 = vsyncadd %s1405, %s1424
          %s1426 = smul.addr %s37, 8
          %s1427 = sadd.s32 %s1422, %s1426
          %s1428 = smul.addr %s1427, 128
          %s1429 = scalar_lea.hbm %s4, %s1428
          %s1430 = sshll.u32 %s1408, 4
          %s1431 = int_to_ptr.vmem [resolvable:$true] %s1430
          %1436 = dma.vmem_to_hbm [thread:$0]  %s1431, 512, %s1429, %s1405, 128, 128, 8
        $region72: #{tpu_custom_call.1} parent=35 // pred_fallthru
          _
        // Predicated region
        $region73: #{tpu_custom_call.1} parent=35 // pred_check
          %p1437 = pneg %p197
        $region74: #{tpu_custom_call.1} parent=35 // pred_check_branch
          %1439 = sbr.rel (%p1437) target = $region76
        $region75: #{tpu_custom_call.1} parent=35 // pred_region
          %s1441 = ssub.s32 128, 128
          %1442 = vsyncadd %s1410, %s1441
          %s1443 = smul.addr %s37, 128
          %s1444 = scalar_lea.hbm %s5, %s1443
          %s1446 = sshll.u32 %s1413, 4
          %s1447 = int_to_ptr.vmem [resolvable:$true] %s1446
          %1449 = dma.vmem_to_hbm [thread:$0]  %s1447, 128, %s1444, %s1410
        $region76: #{tpu_custom_call.1} parent=35 // pred_fallthru
          _
        // Predicated region
        $region77: #{tpu_custom_call.1} parent=35 // pred_check
          %p1450 = pneg %p223
        $region78: #{tpu_custom_call.1} parent=35 // pred_check_branch
          %1452 = sbr.rel (%p1450) target = $region80
        $region79: #{tpu_custom_call.1} parent=35 // pred_region
          %s1454 = ssub.s32 128, 128
          %1455 = vsyncadd %s1415, %s1454
          %s1456 = smul.addr %s37, 128
          %s1457 = scalar_lea.hbm %s6, %s1456
          %s1459 = sshll.u32 %s1418, 4
          %s1460 = int_to_ptr.vmem [resolvable:$true] %s1459
          %1462 = dma.vmem_to_hbm [thread:$0]  %s1460, 128, %s1457, %s1415
        $region80: #{tpu_custom_call.1} parent=35 // pred_fallthru
          _
      $region36: #{tpu_custom_call.1} parent=5 // pred_fallthru
        _
      %p1463 = scmp.le.s32.totalorder 2, %s28
      // Predicated region
      $region81: #{tpu_custom_call.1} parent=5 // pred_check
        %p1464 = pneg %p1463
      $region82: #{tpu_custom_call.1} parent=5 // pred_check_branch
        %1466 = sbr.rel (%p1464) target = $region84
      $region83: #{tpu_custom_call.1} parent=5 // pred_region
        %s1467 = ssub.s32 %s28, 2
        // Predicated region
        $region85: #{tpu_custom_call.1} parent=83 // pred_check
          %p1468 = pneg %p177
        $region86: #{tpu_custom_call.1} parent=83 // pred_check_branch
          %1470 = sbr.rel (%p1468) target = $region88
        $region87: #{tpu_custom_call.1} parent=83 // pred_region
          %s1471 = sand.u32 %s162, 1
          %s1472 = scalar_lea.sflag [#allocation7], %s1471
          %s1473 = sand.u32 %s162, 1
          %s1474 = smul.addr %s1473, 32
          %s1475 = scalar_lea.vmem [#allocation13], %s1474
          %1476 = dma.done %s1472, 512
        $region88: #{tpu_custom_call.1} parent=83 // pred_fallthru
          _
        // Predicated region
        $region89: #{tpu_custom_call.1} parent=83 // pred_check
          %p1477 = pneg %p203
        $region90: #{tpu_custom_call.1} parent=83 // pred_check_branch
          %1479 = sbr.rel (%p1477) target = $region92
        $region91: #{tpu_custom_call.1} parent=83 // pred_region
          %s1480 = sand.u32 %s34, 1
          %s1481 = scalar_lea.sflag [#allocation15], %s1480
          %s1482 = sand.u32 %s188, 1
          %s1483 = smul.addr %s1482, 8
          %s1484 = scalar_lea.vmem [#allocation14], %s1483
          %1485 = dma.done %s1481, 128
        $region92: #{tpu_custom_call.1} parent=83 // pred_fallthru
          _
        // Predicated region
        $region93: #{tpu_custom_call.1} parent=83 // pred_check
          %p1486 = pneg %p229
        $region94: #{tpu_custom_call.1} parent=83 // pred_check_branch
          %1488 = sbr.rel (%p1486) target = $region96
        $region95: #{tpu_custom_call.1} parent=83 // pred_region
          %s1489 = sand.u32 %s34, 1
          %s1490 = scalar_lea.sflag [#allocation15], %s1489
          %s1491 = sand.u32 %s214, 1
          %s1492 = smul.addr %s1491, 8
          %s1493 = scalar_lea.vmem [#allocation16], %s1492
          %1494 = dma.done %s1490, 128
        $region96: #{tpu_custom_call.1} parent=83 // pred_fallthru
          _
      $region84: #{tpu_custom_call.1} parent=5 // pred_fallthru
        _
    $region6: #{tpu_custom_call.1} parent=1 // loop_footer
      %s32 = sadd.s32 1, %s28
    $region7: #{tpu_custom_call.1} parent=1 // loop_footer_branch
      %27 = sbr.rel target = $region3
    $region8: #{tpu_custom_call.1} parent=1 // loop_exit
      _
    %1495 = vsyncpa [#allocation6], 1
    %s1496 = scalar_lea.sflag [#allocation6], 1
    %1497 = vsyncpa %s1496, 1
    %1498 = vsyncpa [#allocation9], 1
    %s1499 = scalar_lea.sflag [#allocation9], 1
    %1500 = vsyncpa %s1499, 1
    %1501 = vsyncpa [#allocation12], 1
    %s1502 = scalar_lea.sflag [#allocation12], 1
    %1503 = vsyncpa %s1502, 1
    %1504 = vsyncpa [#allocation7], 1
    %s1505 = scalar_lea.sflag [#allocation7], 1
    %1506 = vsyncpa %s1505, 1
    %1507 = vsyncpa [#allocation15], 1
    %s1508 = scalar_lea.sflag [#allocation15], 1
    %1509 = vsyncpa %s1508, 1

</llo_original>
